<compile_context>
chip_gen: v5e
topology: v5e:2x2
jax: 0.10.0
libtpu: 0.0.40
codegen_flags: <defaults>
</compile_context>

<pallas_src>
import jax
import jax.numpy as jnp
from jax import lax
from jax.experimental import pallas as pl
from jax.experimental.pallas import tpu as pltpu

N_EMBD = 16
N_HEAD = 4
HEAD_SIZE = N_EMBD // N_HEAD          # 4
FF_HIDDEN = 4 * N_EMBD                # 64
N_LAYER = 3
BLOCK_SIZE = 128
VOCAB_SIZE = 65                       # len(set(text)) is data-dependent; fixed here
VOCAB_PAD = 128                       # lane-dense LM-head width
LN_EPS = 1e-5
NEG_INF = -1e30

# Packed per-layer vector rows: ln1g, ln1b, ln2g, ln2b, bproj, bff2, bff1
VEC_ROWS_PER_LAYER = 7
VEC_ROWS = N_LAYER * VEC_ROWS_PER_LAYER + 3   # + lnfg, lnfb, blm


def _layernorm(x, g, b):
    mu = jnp.mean(x, axis=-1, keepdims=True)
    var = jnp.mean((x - mu) ** 2, axis=-1, keepdims=True)
    return (x - mu) * lax.rsqrt(var + LN_EPS) * g + b


def transformer_kernel(x_ref, wqkv_ref, wproj_ref, wff1_ref, wff2_ref,
                       wlm_ref, vecs_ref, out_ref):
    Bb, T, C = x_ref.shape                         # (B_BLK, T_pad, 16)
    x = x_ref[...].reshape(Bb * T, C)              # flat 2D slab for channel matmuls

    # Additive causal bias, built once per grid step (no extra input / HBM traffic).
    row_ids = lax.broadcasted_iota(jnp.int32, (T, T), 0)
    col_ids = lax.broadcasted_iota(jnp.int32, (T, T), 1)
    mask = jnp.where(col_ids <= row_ids, 0.0, NEG_INF).astype(jnp.float32)

    for l in range(N_LAYER):
        base = l * VEC_ROWS_PER_LAYER
        ln1g = vecs_ref[base + 0, :C]
        ln1b = vecs_ref[base + 1, :C]
        ln2g = vecs_ref[base + 2, :C]
        ln2b = vecs_ref[base + 3, :C]
        bproj = vecs_ref[base + 4, :C]
        bff2 = vecs_ref[base + 5, :C]
        bff1 = vecs_ref[base + 6, :FF_HIDDEN]

        # ---- multi-head self attention on layer_norm1(x), batched over heads ----
        h = _layernorm(x, ln1g, ln1b)                                  # (Bb*T, C)
        qkv = jnp.dot(h, wqkv_ref[l],                                  # fused [k|q|v]
                      preferred_element_type=jnp.float32)              # (Bb*T, 3C)
        qkv3 = qkv.reshape(Bb, T, 3 * C)

        def head_stack(off):
            # Stack the per-head lane slices along a new LEADING axis
            # (cheap major-dim concat; no minor<->major transposes).
            parts = [qkv3[:, :, off + hd * HEAD_SIZE: off + (hd + 1) * HEAD_SIZE]
                     for hd in range(N_HEAD)]
            return jnp.stack(parts, axis=0).reshape(N_HEAD * Bb, T, HEAD_SIZE)

        k = head_stack(0)                      # (H*Bb, T, hs)
        q = head_stack(C)                      # scale already folded into W_q
        v = head_stack(2 * C)

        scores = jnp.einsum('bqd,bkd->bqk', q, k,
                            preferred_element_type=jnp.float32)        # (H*Bb, T, T)
        scores = scores + mask                                         # causal bias
        m = jnp.max(scores, axis=-1, keepdims=True)
        e = jnp.exp(scores - m)
        denom = jnp.sum(e, axis=-1, keepdims=True)
        p = e * pl.reciprocal(denom, approx=True)                      # EUP divide
        # dropout(wei): identity in eval mode
        ctx = jnp.einsum('bqk,bkd->bqd', p, v,
                         preferred_element_type=jnp.float32)           # (H*Bb, T, hs)

        ctx4 = ctx.reshape(N_HEAD, Bb, T, HEAD_SIZE)
        ctx_cat = jnp.concatenate(
            [ctx4[hd].reshape(Bb * T, HEAD_SIZE) for hd in range(N_HEAD)],
            axis=-1)                                                   # (Bb*T, C)
        sa = jnp.dot(ctx_cat, wproj_ref[l],
                     preferred_element_type=jnp.float32)
        # dropout(proj(sa)): identity in eval mode
        x = x + sa + bproj

        # ---- feed forward on layer_norm2(x) ----
        h2 = _layernorm(x, ln2g, ln2b)
        h2 = jnp.dot(h2, wff1_ref[l], preferred_element_type=jnp.float32) + bff1
        h2 = jnp.maximum(h2, 0.0)
        h2 = jnp.dot(h2, wff2_ref[l], preferred_element_type=jnp.float32) + bff2
        # dropout: identity in eval mode
        x = x + h2

    # ---- final layernorm + lane-dense (padded) lm head ----
    vbase = N_LAYER * VEC_ROWS_PER_LAYER
    lnfg = vecs_ref[vbase + 0, :C]
    lnfb = vecs_ref[vbase + 1, :C]
    blm = vecs_ref[vbase + 2, :]                                       # (VOCAB_PAD,)
    x = _layernorm(x, lnfg, lnfb)
    logits = jnp.dot(x, wlm_ref[...], preferred_element_type=jnp.float32) + blm
    out_ref[...] = logits.reshape(Bb, T, VOCAB_PAD)


def init_params(key):
    keys = jax.random.split(key, 16)
    std = 0.02
    nrm = lambda k, shape: (std * jax.random.normal(k, shape)).astype(jnp.float32)
    params = {
        "tok_emb": nrm(keys[0], (VOCAB_SIZE, N_EMBD)),
        "pos_emb": nrm(keys[1], (BLOCK_SIZE, N_EMBD)),
        "wqkv":    nrm(keys[2], (N_LAYER, 3, N_EMBD, N_EMBD)),   # [k, q, v]
        "wproj":   nrm(keys[3], (N_LAYER, N_EMBD, N_EMBD)),
        "bproj":   nrm(keys[4], (N_LAYER, N_EMBD)),
        "ln1g":    jnp.ones((N_LAYER, N_EMBD), jnp.float32),
        "ln1b":    jnp.zeros((N_LAYER, N_EMBD), jnp.float32),
        "ln2g":    jnp.ones((N_LAYER, N_EMBD), jnp.float32),
        "ln2b":    jnp.zeros((N_LAYER, N_EMBD), jnp.float32),
        "wff1":    nrm(keys[5], (N_LAYER, N_EMBD, FF_HIDDEN)),
        "bff1":    nrm(keys[6], (N_LAYER, FF_HIDDEN)),
        "wff2":    nrm(keys[7], (N_LAYER, FF_HIDDEN, N_EMBD)),
        "bff2":    nrm(keys[8], (N_LAYER, N_EMBD)),
        "lnfg":    jnp.ones((1, N_EMBD), jnp.float32),
        "lnfb":    jnp.zeros((1, N_EMBD), jnp.float32),
        "wlm":     nrm(keys[9], (N_EMBD, VOCAB_SIZE)),
        "blm":     nrm(keys[10], (1, VOCAB_SIZE)),
    }
    return params


def prepare_weights(params):
    """One-time prep (outside the jitted forward): fused+scaled QKV, lane-padded
    LM head, and all tiny per-layer vectors packed into a single (24,128) slab."""
    scale = 1.0 / jnp.sqrt(jnp.float32(N_EMBD))   # PyTorch Head uses C**-0.5, C=n_embd
    wqkv = params["wqkv"]
    # Columns [k | q*scale | v]: folds the attention scale into the Q weight.
    wqkv_f = jnp.concatenate([wqkv[:, 0], wqkv[:, 1] * scale, wqkv[:, 2]], axis=-1)

    wlm_p = jnp.pad(params["wlm"], ((0, 0), (0, VOCAB_PAD - VOCAB_SIZE)))

    def pad_row(v):
        return jnp.pad(v, (0, VOCAB_PAD - v.shape[0]))

    rows = []
    for l in range(N_LAYER):
        rows += [pad_row(params["ln1g"][l]), pad_row(params["ln1b"][l]),
                 pad_row(params["ln2g"][l]), pad_row(params["ln2b"][l]),
                 pad_row(params["bproj"][l]), pad_row(params["bff2"][l]),
                 pad_row(params["bff1"][l])]
    rows += [pad_row(params["lnfg"][0]), pad_row(params["lnfb"][0]),
             pad_row(params["blm"][0])]
    vecs = jnp.stack(rows, axis=0)                 # (VEC_ROWS, 128)

    return {
        "tok_emb": params["tok_emb"].astype(jnp.float32),
        "pos_emb": params["pos_emb"].astype(jnp.float32),
        "wqkv_f":  wqkv_f.astype(jnp.float32),
        "wproj":   params["wproj"].astype(jnp.float32),
        "wff1":    params["wff1"].astype(jnp.float32),
        "wff2":    params["wff2"].astype(jnp.float32),
        "wlm_p":   wlm_p.astype(jnp.float32),
        "vecs":    vecs.astype(jnp.float32),
    }


@jax.jit
def bigram_lm_forward(idx, prepared):
    """Returns logits (B, T, vocab_size), matching BigramLanguageModel.forward
    with targets=None (eval mode)."""
    B, T = idx.shape

    # Embedding gather + positional add (glue outside the kernel).
    tok = prepared["tok_emb"][idx]                       # (B, T, C)
    pos = prepared["pos_emb"][:T]                        # (T, C)
    x = (tok + pos[None]).astype(jnp.float32)

    # Pad T to a multiple of 8 (sublane alignment); padded rows sliced off below.
    T_pad = max(8, ((T + 7) // 8) * 8)
    if T_pad != T:
        x = jnp.pad(x, ((0, 0), (0, T_pad - T), (0, 0)))

    # Batch blocking: >=2 grid steps whenever B>=2 (v7x megacore), capped at 16
    # so lane-padded intermediates stay well inside v7x's 64 MiB VMEM.
    B_BLK = min(16, max(1, (B + 1) // 2))
    n_blocks = -(-B // B_BLK)
    B_pad = n_blocks * B_BLK
    if B_pad != B:
        x = jnp.pad(x, ((0, B_pad - B), (0, 0), (0, 0)))

    args = [prepared["wqkv_f"], prepared["wproj"], prepared["wff1"],
            prepared["wff2"], prepared["wlm_p"], prepared["vecs"]]

    def full_spec(shape):
        return pl.BlockSpec(shape, lambda b, _n=len(shape): (0,) * _n)

    in_specs = [pl.BlockSpec((B_BLK, T_pad, N_EMBD), lambda b: (b, 0, 0))]
    in_specs += [full_spec(a.shape) for a in args]
    out_specs = pl.BlockSpec((B_BLK, T_pad, VOCAB_PAD), lambda b: (b, 0, 0))

    logits = pl.pallas_call(
        transformer_kernel,
        grid=(n_blocks,),
        in_specs=in_specs,
        out_specs=out_specs,
        out_shape=jax.ShapeDtypeStruct((B_pad, T_pad, VOCAB_PAD), jnp.float32),
        compiler_params=pltpu.CompilerParams(
            dimension_semantics=("parallel",),
            vmem_limit_bytes=48 * 1024 * 1024),
    )(x, *args)

    return logits[:B, :T, :VOCAB_SIZE]


def reference_forward(idx, params):
    """Pure-JAX reference mirroring the PyTorch math (eval mode)."""
    B, T = idx.shape
    x = params["tok_emb"][idx] + params["pos_emb"][:T][None]
    causal = jnp.tril(jnp.ones((T, T), bool))
    scale = 1.0 / jnp.sqrt(jnp.float32(N_EMBD))
    for l in range(N_LAYER):
        h = _layernorm(x, params["ln1g"][l], params["ln1b"][l])
        k = h @ params["wqkv"][l, 0]
        q = h @ params["wqkv"][l, 1]
        v = h @ params["wqkv"][l, 2]
        outs = []
        for hd in range(N_HEAD):
            sl = slice(hd * HEAD_SIZE, (hd + 1) * HEAD_SIZE)
            wei = jnp.einsum("btd,bsd->bts", q[..., sl], k[..., sl]) * scale
            wei = jnp.where(causal, wei, -jnp.inf)
            wei = jax.nn.softmax(wei, axis=-1)
            outs.append(jnp.einsum("bts,bsd->btd", wei, v[..., sl]))
        sa = jnp.concatenate(outs, axis=-1) @ params["wproj"][l] + params["bproj"][l]
        x = x + sa
        h2 = _layernorm(x, params["ln2g"][l], params["ln2b"][l])
        h2 = jnp.maximum(h2 @ params["wff1"][l] + params["bff1"][l], 0.0)
        x = x + (h2 @ params["wff2"][l] + params["bff2"][l])
    x = _layernorm(x, params["lnfg"][0], params["lnfb"][0])
    return x @ params["wlm"] + params["blm"][0]


if __name__ == "__main__":
    key = jax.random.PRNGKey(0)
    pkey, ikey = jax.random.split(key)
    params = init_params(pkey)
    prepared = prepare_weights(params)     # one-time prep, outside the jitted forward

    B, T = 2, 8
    idx = jax.random.randint(ikey, (B, T), 0, VOCAB_SIZE, dtype=jnp.int32)

    logits = bigram_lm_forward(idx, prepared)
    jax.block_until_ready(logits)

    ref = reference_forward(idx, params)
    assert logits.shape == (B, T, VOCAB_SIZE)
    assert jnp.allclose(logits, ref, atol=1e-3, rtol=1e-3), "mismatch vs JAX reference"

    print("KERNEL_OK")
</pallas_src>

<mosaic_0001>
module attributes {stable_mosaic.version = 11 : i64} {
  func.func @transformer_kernel(%arg0: i32, %arg1: memref<1x8x16xf32, #tpu.memory_space<vmem>>, %arg2: memref<3x16x48xf32, #tpu.memory_space<vmem>>, %arg3: memref<3x16x16xf32, #tpu.memory_space<vmem>>, %arg4: memref<3x16x64xf32, #tpu.memory_space<vmem>>, %arg5: memref<3x64x16xf32, #tpu.memory_space<vmem>>, %arg6: memref<16x128xf32, #tpu.memory_space<vmem>>, %arg7: memref<24x128xf32, #tpu.memory_space<vmem>>, %arg8: memref<1x8x128xf32, #tpu.memory_space<vmem>>) attributes {dimension_semantics = [#tpu.dimension_semantics<parallel>], iteration_bounds = array<i64: 2>, scalar_prefetch = 0 : i64, scratch_operands = 0 : i64, tpu.core_type = #tpu.core_type<tc>, window_params = [{transform_indices = @transform_0, window_bounds = array<i64: 1, 8, 16>}, {pipeline_mode = #tpu.pipeline_mode<synchronous>, transform_indices = @transform_1, window_bounds = array<i64: 3, 16, 48>}, {pipeline_mode = #tpu.pipeline_mode<synchronous>, transform_indices = @transform_2, window_bounds = array<i64: 3, 16, 16>}, {pipeline_mode = #tpu.pipeline_mode<synchronous>, transform_indices = @transform_3, window_bounds = array<i64: 3, 16, 64>}, {pipeline_mode = #tpu.pipeline_mode<synchronous>, transform_indices = @transform_4, window_bounds = array<i64: 3, 64, 16>}, {pipeline_mode = #tpu.pipeline_mode<synchronous>, transform_indices = @transform_5, window_bounds = array<i64: 16, 128>}, {pipeline_mode = #tpu.pipeline_mode<synchronous>, transform_indices = @transform_6, window_bounds = array<i64: 24, 128>}, {transform_indices = @transform_7, window_bounds = array<i64: 1, 8, 128>}]} {
    %c0 = arith.constant 0 : index
    %c0_0 = arith.constant 0 : index
    %c0_1 = arith.constant 0 : index
    %0 = vector.load %arg1[%c0, %c0_0, %c0_1] : memref<1x8x16xf32, #tpu.memory_space<vmem>>, vector<1x8x16xf32>
    %1 = vector.shape_cast %0 : vector<1x8x16xf32> to vector<8x16xf32>
    %2 = tpu.iota {dimensions = array<i32: 0>} : vector<8x8xi32>
    %3 = tpu.iota {dimensions = array<i32: 1>} : vector<8x8xi32>
    %4 = arith.cmpi sle, %3, %2 : vector<8x8xi32>
    %cst = arith.constant 0.000000e+00 : f32
    %cst_2 = arith.constant -1.000000e+30 : f32
    %5 = vector.broadcast %cst : f32 to vector<8x8xf32>
    %6 = vector.broadcast %cst_2 : f32 to vector<8x8xf32>
    %7 = arith.select %4, %5, %6 : vector<8x8xi1>, vector<8x8xf32>
    %c0_3 = arith.constant 0 : index
    %c0_4 = arith.constant 0 : index
    %8 = vector.load %arg7[%c0_3, %c0_4] : memref<24x128xf32, #tpu.memory_space<vmem>>, vector<1x16xf32>
    %9 = vector.shape_cast %8 : vector<1x16xf32> to vector<16xf32>
    %c1 = arith.constant 1 : index
    %c0_5 = arith.constant 0 : index
    %10 = vector.load %arg7[%c1, %c0_5] : memref<24x128xf32, #tpu.memory_space<vmem>>, vector<1x16xf32>
    %11 = vector.shape_cast %10 : vector<1x16xf32> to vector<16xf32>
    %c2 = arith.constant 2 : index
    %c0_6 = arith.constant 0 : index
    %12 = vector.load %arg7[%c2, %c0_6] : memref<24x128xf32, #tpu.memory_space<vmem>>, vector<1x16xf32>
    %13 = vector.shape_cast %12 : vector<1x16xf32> to vector<16xf32>
    %c3 = arith.constant 3 : index
    %c0_7 = arith.constant 0 : index
    %14 = vector.load %arg7[%c3, %c0_7] : memref<24x128xf32, #tpu.memory_space<vmem>>, vector<1x16xf32>
    %15 = vector.shape_cast %14 : vector<1x16xf32> to vector<16xf32>
    %c4 = arith.constant 4 : index
    %c0_8 = arith.constant 0 : index
    %16 = vector.load %arg7[%c4, %c0_8] : memref<24x128xf32, #tpu.memory_space<vmem>>, vector<1x16xf32>
    %17 = vector.shape_cast %16 : vector<1x16xf32> to vector<16xf32>
    %c5 = arith.constant 5 : index
    %c0_9 = arith.constant 0 : index
    %18 = vector.load %arg7[%c5, %c0_9] : memref<24x128xf32, #tpu.memory_space<vmem>>, vector<1x16xf32>
    %19 = vector.shape_cast %18 : vector<1x16xf32> to vector<16xf32>
    %c6 = arith.constant 6 : index
    %c0_10 = arith.constant 0 : index
    %20 = vector.load %arg7[%c6, %c0_10] : memref<24x128xf32, #tpu.memory_space<vmem>>, vector<1x64xf32>
    %21 = vector.shape_cast %20 : vector<1x64xf32> to vector<64xf32>
    %cst_11 = arith.constant dense<0.000000e+00> : vector<8xf32>
    %22 = vector.multi_reduction <add>, %1, %cst_11 [1] : vector<8x16xf32> to vector<8xf32>
    %23 = vector.shape_cast %22 : vector<8xf32> to vector<8x1xf32>
    %cst_12 = arith.constant 1.600000e+01 : f32
    %24 = vector.broadcast %cst_12 : f32 to vector<8x1xf32>
    %25 = arith.divf %23, %24 : vector<8x1xf32>
    %26 = vector.broadcast %25 : vector<8x1xf32> to vector<8x16xf32>
    %27 = arith.subf %1, %26 : vector<8x16xf32>
    %28 = arith.mulf %27, %27 : vector<8x16xf32>
    %cst_13 = arith.constant dense<0.000000e+00> : vector<8xf32>
    %29 = vector.multi_reduction <add>, %28, %cst_13 [1] : vector<8x16xf32> to vector<8xf32>
    %30 = vector.shape_cast %29 : vector<8xf32> to vector<8x1xf32>
    %cst_14 = arith.constant 1.600000e+01 : f32
    %31 = vector.broadcast %cst_14 : f32 to vector<8x1xf32>
    %32 = arith.divf %30, %31 : vector<8x1xf32>
    %33 = vector.broadcast %25 : vector<8x1xf32> to vector<8x16xf32>
    %34 = arith.subf %1, %33 : vector<8x16xf32>
    %cst_15 = arith.constant 9.99999974E-6 : f32
    %35 = vector.broadcast %cst_15 : f32 to vector<8x1xf32>
    %36 = arith.addf %32, %35 : vector<8x1xf32>
    %37 = math.rsqrt %36 : vector<8x1xf32>
    %38 = vector.broadcast %37 : vector<8x1xf32> to vector<8x16xf32>
    %39 = arith.mulf %34, %38 : vector<8x16xf32>
    %40 = vector.shape_cast %9 : vector<16xf32> to vector<1x16xf32>
    %41 = vector.broadcast %40 : vector<1x16xf32> to vector<8x16xf32>
    %42 = arith.mulf %39, %41 : vector<8x16xf32>
    %43 = vector.shape_cast %11 : vector<16xf32> to vector<1x16xf32>
    %44 = vector.broadcast %43 : vector<1x16xf32> to vector<8x16xf32>
    %45 = arith.addf %42, %44 : vector<8x16xf32>
    %c0_16 = arith.constant 0 : index
    %c0_17 = arith.constant 0 : index
    %c0_18 = arith.constant 0 : index
    %46 = vector.load %arg2[%c0_16, %c0_17, %c0_18] : memref<3x16x48xf32, #tpu.memory_space<vmem>>, vector<1x16x48xf32>
    %47 = vector.shape_cast %46 : vector<1x16x48xf32> to vector<16x48xf32>
    %cst_19 = arith.constant dense<0.000000e+00> : vector<8x48xf32>
    %48 = tpu.matmul %45, %47, %cst_19 {dimension_numbers = #tpu.dot_dimension_numbers<[1], [0], [0], [1], [0, 0, 1, 1], [], []>} : vector<8x16xf32>, vector<16x48xf32>, vector<8x48xf32> -> vector<8x48xf32>
    %49 = vector.shape_cast %48 : vector<8x48xf32> to vector<1x8x48xf32>
    %50 = vector.extract_strided_slice %49 {offsets = [0, 0, 0], sizes = [1, 8, 4], strides = [1, 1, 1]} : vector<1x8x48xf32> to vector<1x8x4xf32>
    %51 = vector.extract_strided_slice %49 {offsets = [0, 0, 4], sizes = [1, 8, 4], strides = [1, 1, 1]} : vector<1x8x48xf32> to vector<1x8x4xf32>
    %52 = vector.extract_strided_slice %49 {offsets = [0, 0, 8], sizes = [1, 8, 4], strides = [1, 1, 1]} : vector<1x8x48xf32> to vector<1x8x4xf32>
    %53 = vector.extract_strided_slice %49 {offsets = [0, 0, 12], sizes = [1, 8, 4], strides = [1, 1, 1]} : vector<1x8x48xf32> to vector<1x8x4xf32>
    %54 = vector.shape_cast %50 : vector<1x8x4xf32> to vector<1x1x8x4xf32>
    %55 = vector.shape_cast %51 : vector<1x8x4xf32> to vector<1x1x8x4xf32>
    %56 = vector.shape_cast %52 : vector<1x8x4xf32> to vector<1x1x8x4xf32>
    %57 = vector.shape_cast %53 : vector<1x8x4xf32> to vector<1x1x8x4xf32>
    %58 = tpu.concatenate %54, %55, %56, %57 in 0 : vector<1x1x8x4xf32>, vector<1x1x8x4xf32>, vector<1x1x8x4xf32>, vector<1x1x8x4xf32> -> vector<4x1x8x4xf32>
    %59 = vector.shape_cast %58 : vector<4x1x8x4xf32> to vector<4x8x4xf32>
    %60 = vector.extract_strided_slice %49 {offsets = [0, 0, 16], sizes = [1, 8, 4], strides = [1, 1, 1]} : vector<1x8x48xf32> to vector<1x8x4xf32>
    %61 = vector.extract_strided_slice %49 {offsets = [0, 0, 20], sizes = [1, 8, 4], strides = [1, 1, 1]} : vector<1x8x48xf32> to vector<1x8x4xf32>
    %62 = vector.extract_strided_slice %49 {offsets = [0, 0, 24], sizes = [1, 8, 4], strides = [1, 1, 1]} : vector<1x8x48xf32> to vector<1x8x4xf32>
    %63 = vector.extract_strided_slice %49 {offsets = [0, 0, 28], sizes = [1, 8, 4], strides = [1, 1, 1]} : vector<1x8x48xf32> to vector<1x8x4xf32>
    %64 = vector.shape_cast %60 : vector<1x8x4xf32> to vector<1x1x8x4xf32>
    %65 = vector.shape_cast %61 : vector<1x8x4xf32> to vector<1x1x8x4xf32>
    %66 = vector.shape_cast %62 : vector<1x8x4xf32> to vector<1x1x8x4xf32>
    %67 = vector.shape_cast %63 : vector<1x8x4xf32> to vector<1x1x8x4xf32>
    %68 = tpu.concatenate %64, %65, %66, %67 in 0 : vector<1x1x8x4xf32>, vector<1x1x8x4xf32>, vector<1x1x8x4xf32>, vector<1x1x8x4xf32> -> vector<4x1x8x4xf32>
    %69 = vector.shape_cast %68 : vector<4x1x8x4xf32> to vector<4x8x4xf32>
    %70 = vector.extract_strided_slice %49 {offsets = [0, 0, 32], sizes = [1, 8, 4], strides = [1, 1, 1]} : vector<1x8x48xf32> to vector<1x8x4xf32>
    %71 = vector.extract_strided_slice %49 {offsets = [0, 0, 36], sizes = [1, 8, 4], strides = [1, 1, 1]} : vector<1x8x48xf32> to vector<1x8x4xf32>
    %72 = vector.extract_strided_slice %49 {offsets = [0, 0, 40], sizes = [1, 8, 4], strides = [1, 1, 1]} : vector<1x8x48xf32> to vector<1x8x4xf32>
    %73 = vector.extract_strided_slice %49 {offsets = [0, 0, 44], sizes = [1, 8, 4], strides = [1, 1, 1]} : vector<1x8x48xf32> to vector<1x8x4xf32>
    %74 = vector.shape_cast %70 : vector<1x8x4xf32> to vector<1x1x8x4xf32>
    %75 = vector.shape_cast %71 : vector<1x8x4xf32> to vector<1x1x8x4xf32>
    %76 = vector.shape_cast %72 : vector<1x8x4xf32> to vector<1x1x8x4xf32>
    %77 = vector.shape_cast %73 : vector<1x8x4xf32> to vector<1x1x8x4xf32>
    %78 = tpu.concatenate %74, %75, %76, %77 in 0 : vector<1x1x8x4xf32>, vector<1x1x8x4xf32>, vector<1x1x8x4xf32>, vector<1x1x8x4xf32> -> vector<4x1x8x4xf32>
    %79 = vector.shape_cast %78 : vector<4x1x8x4xf32> to vector<4x8x4xf32>
    "tpu.trace_start"() <{level = 10 : i32, message = "bqd,bkd->bqk"}> : () -> ()
    %cst_20 = arith.constant dense<0.000000e+00> : vector<4x8x8xf32>
    %80 = tpu.matmul %69, %59, %cst_20 {dimension_numbers = #tpu.dot_dimension_numbers<[2], [2], [1], [1], [0, 0, 0, 1, 1, 1], [0], [0]>} : vector<4x8x4xf32>, vector<4x8x4xf32>, vector<4x8x8xf32> -> vector<4x8x8xf32>
    "tpu.trace_stop"() : () -> ()
    %81 = vector.shape_cast %7 : vector<8x8xf32> to vector<1x8x8xf32>
    %82 = vector.broadcast %81 : vector<1x8x8xf32> to vector<4x8x8xf32>
    %83 = arith.addf %80, %82 : vector<4x8x8xf32>
    %cst_21 = arith.constant dense<0xFF800000> : vector<4x8xf32>
    %84 = vector.multi_reduction <maximumf>, %83, %cst_21 [2] : vector<4x8x8xf32> to vector<4x8xf32>
    %85 = vector.shape_cast %84 : vector<4x8xf32> to vector<4x8x1xf32>
    %86 = vector.broadcast %85 : vector<4x8x1xf32> to vector<4x8x8xf32>
    %87 = arith.subf %83, %86 : vector<4x8x8xf32>
    %88 = math.exp %87 : vector<4x8x8xf32>
    %cst_22 = arith.constant dense<0.000000e+00> : vector<4x8xf32>
    %89 = vector.multi_reduction <add>, %88, %cst_22 [2] : vector<4x8x8xf32> to vector<4x8xf32>
    %90 = vector.shape_cast %89 : vector<4x8xf32> to vector<4x8x1xf32>
    %91 = tpu.reciprocal %90 {approx = true} : vector<4x8x1xf32> -> vector<4x8x1xf32>
    %92 = vector.broadcast %91 : vector<4x8x1xf32> to vector<4x8x8xf32>
    %93 = arith.mulf %88, %92 : vector<4x8x8xf32>
    "tpu.trace_start"() <{level = 10 : i32, message = "bqk,bkd->bqd"}> : () -> ()
    %cst_23 = arith.constant dense<0.000000e+00> : vector<4x8x4xf32>
    %94 = tpu.matmul %93, %79, %cst_23 {dimension_numbers = #tpu.dot_dimension_numbers<[2], [1], [1], [2], [0, 0, 0, 1, 1, 2], [0], [0]>} : vector<4x8x8xf32>, vector<4x8x4xf32>, vector<4x8x4xf32> -> vector<4x8x4xf32>
    "tpu.trace_stop"() : () -> ()
    %95 = vector.shape_cast %94 : vector<4x8x4xf32> to vector<4x1x8x4xf32>
    %96 = vector.extract_strided_slice %95 {offsets = [0, 0, 0, 0], sizes = [1, 1, 8, 4], strides = [1, 1, 1, 1]} : vector<4x1x8x4xf32> to vector<1x1x8x4xf32>
    %97 = vector.shape_cast %96 : vector<1x1x8x4xf32> to vector<1x8x4xf32>
    %98 = vector.shape_cast %97 : vector<1x8x4xf32> to vector<8x4xf32>
    %99 = vector.extract_strided_slice %95 {offsets = [1, 0, 0, 0], sizes = [1, 1, 8, 4], strides = [1, 1, 1, 1]} : vector<4x1x8x4xf32> to vector<1x1x8x4xf32>
    %100 = vector.shape_cast %99 : vector<1x1x8x4xf32> to vector<1x8x4xf32>
    %101 = vector.shape_cast %100 : vector<1x8x4xf32> to vector<8x4xf32>
    %102 = vector.extract_strided_slice %95 {offsets = [2, 0, 0, 0], sizes = [1, 1, 8, 4], strides = [1, 1, 1, 1]} : vector<4x1x8x4xf32> to vector<1x1x8x4xf32>
    %103 = vector.shape_cast %102 : vector<1x1x8x4xf32> to vector<1x8x4xf32>
    %104 = vector.shape_cast %103 : vector<1x8x4xf32> to vector<8x4xf32>
    %105 = vector.extract_strided_slice %95 {offsets = [3, 0, 0, 0], sizes = [1, 1, 8, 4], strides = [1, 1, 1, 1]} : vector<4x1x8x4xf32> to vector<1x1x8x4xf32>
    %106 = vector.shape_cast %105 : vector<1x1x8x4xf32> to vector<1x8x4xf32>
    %107 = vector.shape_cast %106 : vector<1x8x4xf32> to vector<8x4xf32>
    %108 = tpu.concatenate %98, %101, %104, %107 in 1 : vector<8x4xf32>, vector<8x4xf32>, vector<8x4xf32>, vector<8x4xf32> -> vector<8x16xf32>
    %c0_24 = arith.constant 0 : index
    %c0_25 = arith.constant 0 : index
    %c0_26 = arith.constant 0 : index
    %109 = vector.load %arg3[%c0_24, %c0_25, %c0_26] : memref<3x16x16xf32, #tpu.memory_space<vmem>>, vector<1x16x16xf32>
    %110 = vector.shape_cast %109 : vector<1x16x16xf32> to vector<16x16xf32>
    %cst_27 = arith.constant dense<0.000000e+00> : vector<8x16xf32>
    %111 = tpu.matmul %108, %110, %cst_27 {dimension_numbers = #tpu.dot_dimension_numbers<[1], [0], [0], [1], [0, 0, 1, 1], [], []>} : vector<8x16xf32>, vector<16x16xf32>, vector<8x16xf32> -> vector<8x16xf32>
    %112 = arith.addf %1, %111 : vector<8x16xf32>
    %113 = vector.shape_cast %17 : vector<16xf32> to vector<1x16xf32>
    %114 = vector.broadcast %113 : vector<1x16xf32> to vector<8x16xf32>
    %115 = arith.addf %112, %114 : vector<8x16xf32>
    %cst_28 = arith.constant dense<0.000000e+00> : vector<8xf32>
    %116 = vector.multi_reduction <add>, %115, %cst_28 [1] : vector<8x16xf32> to vector<8xf32>
    %117 = vector.shape_cast %116 : vector<8xf32> to vector<8x1xf32>
    %cst_29 = arith.constant 1.600000e+01 : f32
    %118 = vector.broadcast %cst_29 : f32 to vector<8x1xf32>
    %119 = arith.divf %117, %118 : vector<8x1xf32>
    %120 = vector.broadcast %119 : vector<8x1xf32> to vector<8x16xf32>
    %121 = arith.subf %115, %120 : vector<8x16xf32>
    %122 = arith.mulf %121, %121 : vector<8x16xf32>
    %cst_30 = arith.constant dense<0.000000e+00> : vector<8xf32>
    %123 = vector.multi_reduction <add>, %122, %cst_30 [1] : vector<8x16xf32> to vector<8xf32>
    %124 = vector.shape_cast %123 : vector<8xf32> to vector<8x1xf32>
    %cst_31 = arith.constant 1.600000e+01 : f32
    %125 = vector.broadcast %cst_31 : f32 to vector<8x1xf32>
    %126 = arith.divf %124, %125 : vector<8x1xf32>
    %127 = vector.broadcast %119 : vector<8x1xf32> to vector<8x16xf32>
    %128 = arith.subf %115, %127 : vector<8x16xf32>
    %cst_32 = arith.constant 9.99999974E-6 : f32
    %129 = vector.broadcast %cst_32 : f32 to vector<8x1xf32>
    %130 = arith.addf %126, %129 : vector<8x1xf32>
    %131 = math.rsqrt %130 : vector<8x1xf32>
    %132 = vector.broadcast %131 : vector<8x1xf32> to vector<8x16xf32>
    %133 = arith.mulf %128, %132 : vector<8x16xf32>
    %134 = vector.shape_cast %13 : vector<16xf32> to vector<1x16xf32>
    %135 = vector.broadcast %134 : vector<1x16xf32> to vector<8x16xf32>
    %136 = arith.mulf %133, %135 : vector<8x16xf32>
    %137 = vector.shape_cast %15 : vector<16xf32> to vector<1x16xf32>
    %138 = vector.broadcast %137 : vector<1x16xf32> to vector<8x16xf32>
    %139 = arith.addf %136, %138 : vector<8x16xf32>
    %c0_33 = arith.constant 0 : index
    %c0_34 = arith.constant 0 : index
    %c0_35 = arith.constant 0 : index
    %140 = vector.load %arg4[%c0_33, %c0_34, %c0_35] : memref<3x16x64xf32, #tpu.memory_space<vmem>>, vector<1x16x64xf32>
    %141 = vector.shape_cast %140 : vector<1x16x64xf32> to vector<16x64xf32>
    %cst_36 = arith.constant dense<0.000000e+00> : vector<8x64xf32>
    %142 = tpu.matmul %139, %141, %cst_36 {dimension_numbers = #tpu.dot_dimension_numbers<[1], [0], [0], [1], [0, 0, 1, 1], [], []>} : vector<8x16xf32>, vector<16x64xf32>, vector<8x64xf32> -> vector<8x64xf32>
    %143 = vector.shape_cast %21 : vector<64xf32> to vector<1x64xf32>
    %144 = vector.broadcast %143 : vector<1x64xf32> to vector<8x64xf32>
    %145 = arith.addf %142, %144 : vector<8x64xf32>
    %cst_37 = arith.constant 0.000000e+00 : f32
    %146 = vector.broadcast %cst_37 : f32 to vector<8x64xf32>
    %147 = arith.maximumf %145, %146 : vector<8x64xf32>
    %c0_38 = arith.constant 0 : index
    %c0_39 = arith.constant 0 : index
    %c0_40 = arith.constant 0 : index
    %148 = vector.load %arg5[%c0_38, %c0_39, %c0_40] : memref<3x64x16xf32, #tpu.memory_space<vmem>>, vector<1x64x16xf32>
    %149 = vector.shape_cast %148 : vector<1x64x16xf32> to vector<64x16xf32>
    %cst_41 = arith.constant dense<0.000000e+00> : vector<8x16xf32>
    %150 = tpu.matmul %147, %149, %cst_41 {dimension_numbers = #tpu.dot_dimension_numbers<[1], [0], [0], [1], [0, 0, 1, 1], [], []>} : vector<8x64xf32>, vector<64x16xf32>, vector<8x16xf32> -> vector<8x16xf32>
    %151 = vector.shape_cast %19 : vector<16xf32> to vector<1x16xf32>
    %152 = vector.broadcast %151 : vector<1x16xf32> to vector<8x16xf32>
    %153 = arith.addf %150, %152 : vector<8x16xf32>
    %154 = arith.addf %115, %153 : vector<8x16xf32>
    %c7 = arith.constant 7 : index
    %c0_42 = arith.constant 0 : index
    %155 = vector.load %arg7[%c7, %c0_42] : memref<24x128xf32, #tpu.memory_space<vmem>>, vector<1x16xf32>
    %156 = vector.shape_cast %155 : vector<1x16xf32> to vector<16xf32>
    %c8 = arith.constant 8 : index
    %c0_43 = arith.constant 0 : index
    %157 = vector.load %arg7[%c8, %c0_43] : memref<24x128xf32, #tpu.memory_space<vmem>>, vector<1x16xf32>
    %158 = vector.shape_cast %157 : vector<1x16xf32> to vector<16xf32>
    %c9 = arith.constant 9 : index
    %c0_44 = arith.constant 0 : index
    %159 = vector.load %arg7[%c9, %c0_44] : memref<24x128xf32, #tpu.memory_space<vmem>>, vector<1x16xf32>
    %160 = vector.shape_cast %159 : vector<1x16xf32> to vector<16xf32>
    %c10 = arith.constant 10 : index
    %c0_45 = arith.constant 0 : index
    %161 = vector.load %arg7[%c10, %c0_45] : memref<24x128xf32, #tpu.memory_space<vmem>>, vector<1x16xf32>
    %162 = vector.shape_cast %161 : vector<1x16xf32> to vector<16xf32>
    %c11 = arith.constant 11 : index
    %c0_46 = arith.constant 0 : index
    %163 = vector.load %arg7[%c11, %c0_46] : memref<24x128xf32, #tpu.memory_space<vmem>>, vector<1x16xf32>
    %164 = vector.shape_cast %163 : vector<1x16xf32> to vector<16xf32>
    %c12 = arith.constant 12 : index
    %c0_47 = arith.constant 0 : index
    %165 = vector.load %arg7[%c12, %c0_47] : memref<24x128xf32, #tpu.memory_space<vmem>>, vector<1x16xf32>
    %166 = vector.shape_cast %165 : vector<1x16xf32> to vector<16xf32>
    %c13 = arith.constant 13 : index
    %c0_48 = arith.constant 0 : index
    %167 = vector.load %arg7[%c13, %c0_48] : memref<24x128xf32, #tpu.memory_space<vmem>>, vector<1x64xf32>
    %168 = vector.shape_cast %167 : vector<1x64xf32> to vector<64xf32>
    %cst_49 = arith.constant dense<0.000000e+00> : vector<8xf32>
    %169 = vector.multi_reduction <add>, %154, %cst_49 [1] : vector<8x16xf32> to vector<8xf32>
    %170 = vector.shape_cast %169 : vector<8xf32> to vector<8x1xf32>
    %cst_50 = arith.constant 1.600000e+01 : f32
    %171 = vector.broadcast %cst_50 : f32 to vector<8x1xf32>
    %172 = arith.divf %170, %171 : vector<8x1xf32>
    %173 = vector.broadcast %172 : vector<8x1xf32> to vector<8x16xf32>
    %174 = arith.subf %154, %173 : vector<8x16xf32>
    %175 = arith.mulf %174, %174 : vector<8x16xf32>
    %cst_51 = arith.constant dense<0.000000e+00> : vector<8xf32>
    %176 = vector.multi_reduction <add>, %175, %cst_51 [1] : vector<8x16xf32> to vector<8xf32>
    %177 = vector.shape_cast %176 : vector<8xf32> to vector<8x1xf32>
    %cst_52 = arith.constant 1.600000e+01 : f32
    %178 = vector.broadcast %cst_52 : f32 to vector<8x1xf32>
    %179 = arith.divf %177, %178 : vector<8x1xf32>
    %180 = vector.broadcast %172 : vector<8x1xf32> to vector<8x16xf32>
    %181 = arith.subf %154, %180 : vector<8x16xf32>
    %cst_53 = arith.constant 9.99999974E-6 : f32
    %182 = vector.broadcast %cst_53 : f32 to vector<8x1xf32>
    %183 = arith.addf %179, %182 : vector<8x1xf32>
    %184 = math.rsqrt %183 : vector<8x1xf32>
    %185 = vector.broadcast %184 : vector<8x1xf32> to vector<8x16xf32>
    %186 = arith.mulf %181, %185 : vector<8x16xf32>
    %187 = vector.shape_cast %156 : vector<16xf32> to vector<1x16xf32>
    %188 = vector.broadcast %187 : vector<1x16xf32> to vector<8x16xf32>
    %189 = arith.mulf %186, %188 : vector<8x16xf32>
    %190 = vector.shape_cast %158 : vector<16xf32> to vector<1x16xf32>
    %191 = vector.broadcast %190 : vector<1x16xf32> to vector<8x16xf32>
    %192 = arith.addf %189, %191 : vector<8x16xf32>
    %c1_54 = arith.constant 1 : index
    %c0_55 = arith.constant 0 : index
    %c0_56 = arith.constant 0 : index
    %193 = vector.load %arg2[%c1_54, %c0_55, %c0_56] : memref<3x16x48xf32, #tpu.memory_space<vmem>>, vector<1x16x48xf32>
    %194 = vector.shape_cast %193 : vector<1x16x48xf32> to vector<16x48xf32>
    %cst_57 = arith.constant dense<0.000000e+00> : vector<8x48xf32>
    %195 = tpu.matmul %192, %194, %cst_57 {dimension_numbers = #tpu.dot_dimension_numbers<[1], [0], [0], [1], [0, 0, 1, 1], [], []>} : vector<8x16xf32>, vector<16x48xf32>, vector<8x48xf32> -> vector<8x48xf32>
    %196 = vector.shape_cast %195 : vector<8x48xf32> to vector<1x8x48xf32>
    %197 = vector.extract_strided_slice %196 {offsets = [0, 0, 0], sizes = [1, 8, 4], strides = [1, 1, 1]} : vector<1x8x48xf32> to vector<1x8x4xf32>
    %198 = vector.extract_strided_slice %196 {offsets = [0, 0, 4], sizes = [1, 8, 4], strides = [1, 1, 1]} : vector<1x8x48xf32> to vector<1x8x4xf32>
    %199 = vector.extract_strided_slice %196 {offsets = [0, 0, 8], sizes = [1, 8, 4], strides = [1, 1, 1]} : vector<1x8x48xf32> to vector<1x8x4xf32>
    %200 = vector.extract_strided_slice %196 {offsets = [0, 0, 12], sizes = [1, 8, 4], strides = [1, 1, 1]} : vector<1x8x48xf32> to vector<1x8x4xf32>
    %201 = vector.shape_cast %197 : vector<1x8x4xf32> to vector<1x1x8x4xf32>
    %202 = vector.shape_cast %198 : vector<1x8x4xf32> to vector<1x1x8x4xf32>
    %203 = vector.shape_cast %199 : vector<1x8x4xf32> to vector<1x1x8x4xf32>
    %204 = vector.shape_cast %200 : vector<1x8x4xf32> to vector<1x1x8x4xf32>
    %205 = tpu.concatenate %201, %202, %203, %204 in 0 : vector<1x1x8x4xf32>, vector<1x1x8x4xf32>, vector<1x1x8x4xf32>, vector<1x1x8x4xf32> -> vector<4x1x8x4xf32>
    %206 = vector.shape_cast %205 : vector<4x1x8x4xf32> to vector<4x8x4xf32>
    %207 = vector.extract_strided_slice %196 {offsets = [0, 0, 16], sizes = [1, 8, 4], strides = [1, 1, 1]} : vector<1x8x48xf32> to vector<1x8x4xf32>
    %208 = vector.extract_strided_slice %196 {offsets = [0, 0, 20], sizes = [1, 8, 4], strides = [1, 1, 1]} : vector<1x8x48xf32> to vector<1x8x4xf32>
    %209 = vector.extract_strided_slice %196 {offsets = [0, 0, 24], sizes = [1, 8, 4], strides = [1, 1, 1]} : vector<1x8x48xf32> to vector<1x8x4xf32>
    %210 = vector.extract_strided_slice %196 {offsets = [0, 0, 28], sizes = [1, 8, 4], strides = [1, 1, 1]} : vector<1x8x48xf32> to vector<1x8x4xf32>
    %211 = vector.shape_cast %207 : vector<1x8x4xf32> to vector<1x1x8x4xf32>
    %212 = vector.shape_cast %208 : vector<1x8x4xf32> to vector<1x1x8x4xf32>
    %213 = vector.shape_cast %209 : vector<1x8x4xf32> to vector<1x1x8x4xf32>
    %214 = vector.shape_cast %210 : vector<1x8x4xf32> to vector<1x1x8x4xf32>
    %215 = tpu.concatenate %211, %212, %213, %214 in 0 : vector<1x1x8x4xf32>, vector<1x1x8x4xf32>, vector<1x1x8x4xf32>, vector<1x1x8x4xf32> -> vector<4x1x8x4xf32>
    %216 = vector.shape_cast %215 : vector<4x1x8x4xf32> to vector<4x8x4xf32>
    %217 = vector.extract_strided_slice %196 {offsets = [0, 0, 32], sizes = [1, 8, 4], strides = [1, 1, 1]} : vector<1x8x48xf32> to vector<1x8x4xf32>
    %218 = vector.extract_strided_slice %196 {offsets = [0, 0, 36], sizes = [1, 8, 4], strides = [1, 1, 1]} : vector<1x8x48xf32> to vector<1x8x4xf32>
    %219 = vector.extract_strided_slice %196 {offsets = [0, 0, 40], sizes = [1, 8, 4], strides = [1, 1, 1]} : vector<1x8x48xf32> to vector<1x8x4xf32>
    %220 = vector.extract_strided_slice %196 {offsets = [0, 0, 44], sizes = [1, 8, 4], strides = [1, 1, 1]} : vector<1x8x48xf32> to vector<1x8x4xf32>
    %221 = vector.shape_cast %217 : vector<1x8x4xf32> to vector<1x1x8x4xf32>
    %222 = vector.shape_cast %218 : vector<1x8x4xf32> to vector<1x1x8x4xf32>
    %223 = vector.shape_cast %219 : vector<1x8x4xf32> to vector<1x1x8x4xf32>
    %224 = vector.shape_cast %220 : vector<1x8x4xf32> to vector<1x1x8x4xf32>
    %225 = tpu.concatenate %221, %222, %223, %224 in 0 : vector<1x1x8x4xf32>, vector<1x1x8x4xf32>, vector<1x1x8x4xf32>, vector<1x1x8x4xf32> -> vector<4x1x8x4xf32>
    %226 = vector.shape_cast %225 : vector<4x1x8x4xf32> to vector<4x8x4xf32>
    "tpu.trace_start"() <{level = 10 : i32, message = "bqd,bkd->bqk"}> : () -> ()
    %cst_58 = arith.constant dense<0.000000e+00> : vector<4x8x8xf32>
    %227 = tpu.matmul %216, %206, %cst_58 {dimension_numbers = #tpu.dot_dimension_numbers<[2], [2], [1], [1], [0, 0, 0, 1, 1, 1], [0], [0]>} : vector<4x8x4xf32>, vector<4x8x4xf32>, vector<4x8x8xf32> -> vector<4x8x8xf32>
    "tpu.trace_stop"() : () -> ()
    %228 = vector.shape_cast %7 : vector<8x8xf32> to vector<1x8x8xf32>
    %229 = vector.broadcast %228 : vector<1x8x8xf32> to vector<4x8x8xf32>
    %230 = arith.addf %227, %229 : vector<4x8x8xf32>
    %cst_59 = arith.constant dense<0xFF800000> : vector<4x8xf32>
    %231 = vector.multi_reduction <maximumf>, %230, %cst_59 [2] : vector<4x8x8xf32> to vector<4x8xf32>
    %232 = vector.shape_cast %231 : vector<4x8xf32> to vector<4x8x1xf32>
    %233 = vector.broadcast %232 : vector<4x8x1xf32> to vector<4x8x8xf32>
    %234 = arith.subf %230, %233 : vector<4x8x8xf32>
    %235 = math.exp %234 : vector<4x8x8xf32>
    %cst_60 = arith.constant dense<0.000000e+00> : vector<4x8xf32>
    %236 = vector.multi_reduction <add>, %235, %cst_60 [2] : vector<4x8x8xf32> to vector<4x8xf32>
    %237 = vector.shape_cast %236 : vector<4x8xf32> to vector<4x8x1xf32>
    %238 = tpu.reciprocal %237 {approx = true} : vector<4x8x1xf32> -> vector<4x8x1xf32>
    %239 = vector.broadcast %238 : vector<4x8x1xf32> to vector<4x8x8xf32>
    %240 = arith.mulf %235, %239 : vector<4x8x8xf32>
    "tpu.trace_start"() <{level = 10 : i32, message = "bqk,bkd->bqd"}> : () -> ()
    %cst_61 = arith.constant dense<0.000000e+00> : vector<4x8x4xf32>
    %241 = tpu.matmul %240, %226, %cst_61 {dimension_numbers = #tpu.dot_dimension_numbers<[2], [1], [1], [2], [0, 0, 0, 1, 1, 2], [0], [0]>} : vector<4x8x8xf32>, vector<4x8x4xf32>, vector<4x8x4xf32> -> vector<4x8x4xf32>
    "tpu.trace_stop"() : () -> ()
    %242 = vector.shape_cast %241 : vector<4x8x4xf32> to vector<4x1x8x4xf32>
    %243 = vector.extract_strided_slice %242 {offsets = [0, 0, 0, 0], sizes = [1, 1, 8, 4], strides = [1, 1, 1, 1]} : vector<4x1x8x4xf32> to vector<1x1x8x4xf32>
    %244 = vector.shape_cast %243 : vector<1x1x8x4xf32> to vector<1x8x4xf32>
    %245 = vector.shape_cast %244 : vector<1x8x4xf32> to vector<8x4xf32>
    %246 = vector.extract_strided_slice %242 {offsets = [1, 0, 0, 0], sizes = [1, 1, 8, 4], strides = [1, 1, 1, 1]} : vector<4x1x8x4xf32> to vector<1x1x8x4xf32>
    %247 = vector.shape_cast %246 : vector<1x1x8x4xf32> to vector<1x8x4xf32>
    %248 = vector.shape_cast %247 : vector<1x8x4xf32> to vector<8x4xf32>
    %249 = vector.extract_strided_slice %242 {offsets = [2, 0, 0, 0], sizes = [1, 1, 8, 4], strides = [1, 1, 1, 1]} : vector<4x1x8x4xf32> to vector<1x1x8x4xf32>
    %250 = vector.shape_cast %249 : vector<1x1x8x4xf32> to vector<1x8x4xf32>
    %251 = vector.shape_cast %250 : vector<1x8x4xf32> to vector<8x4xf32>
    %252 = vector.extract_strided_slice %242 {offsets = [3, 0, 0, 0], sizes = [1, 1, 8, 4], strides = [1, 1, 1, 1]} : vector<4x1x8x4xf32> to vector<1x1x8x4xf32>
    %253 = vector.shape_cast %252 : vector<1x1x8x4xf32> to vector<1x8x4xf32>
    %254 = vector.shape_cast %253 : vector<1x8x4xf32> to vector<8x4xf32>
    %255 = tpu.concatenate %245, %248, %251, %254 in 1 : vector<8x4xf32>, vector<8x4xf32>, vector<8x4xf32>, vector<8x4xf32> -> vector<8x16xf32>
    %c1_62 = arith.constant 1 : index
    %c0_63 = arith.constant 0 : index
    %c0_64 = arith.constant 0 : index
    %256 = vector.load %arg3[%c1_62, %c0_63, %c0_64] : memref<3x16x16xf32, #tpu.memory_space<vmem>>, vector<1x16x16xf32>
    %257 = vector.shape_cast %256 : vector<1x16x16xf32> to vector<16x16xf32>
    %cst_65 = arith.constant dense<0.000000e+00> : vector<8x16xf32>
    %258 = tpu.matmul %255, %257, %cst_65 {dimension_numbers = #tpu.dot_dimension_numbers<[1], [0], [0], [1], [0, 0, 1, 1], [], []>} : vector<8x16xf32>, vector<16x16xf32>, vector<8x16xf32> -> vector<8x16xf32>
    %259 = arith.addf %154, %258 : vector<8x16xf32>
    %260 = vector.shape_cast %164 : vector<16xf32> to vector<1x16xf32>
    %261 = vector.broadcast %260 : vector<1x16xf32> to vector<8x16xf32>
    %262 = arith.addf %259, %261 : vector<8x16xf32>
    %cst_66 = arith.constant dense<0.000000e+00> : vector<8xf32>
    %263 = vector.multi_reduction <add>, %262, %cst_66 [1] : vector<8x16xf32> to vector<8xf32>
    %264 = vector.shape_cast %263 : vector<8xf32> to vector<8x1xf32>
    %cst_67 = arith.constant 1.600000e+01 : f32
    %265 = vector.broadcast %cst_67 : f32 to vector<8x1xf32>
    %266 = arith.divf %264, %265 : vector<8x1xf32>
    %267 = vector.broadcast %266 : vector<8x1xf32> to vector<8x16xf32>
    %268 = arith.subf %262, %267 : vector<8x16xf32>
    %269 = arith.mulf %268, %268 : vector<8x16xf32>
    %cst_68 = arith.constant dense<0.000000e+00> : vector<8xf32>
    %270 = vector.multi_reduction <add>, %269, %cst_68 [1] : vector<8x16xf32> to vector<8xf32>
    %271 = vector.shape_cast %270 : vector<8xf32> to vector<8x1xf32>
    %cst_69 = arith.constant 1.600000e+01 : f32
    %272 = vector.broadcast %cst_69 : f32 to vector<8x1xf32>
    %273 = arith.divf %271, %272 : vector<8x1xf32>
    %274 = vector.broadcast %266 : vector<8x1xf32> to vector<8x16xf32>
    %275 = arith.subf %262, %274 : vector<8x16xf32>
    %cst_70 = arith.constant 9.99999974E-6 : f32
    %276 = vector.broadcast %cst_70 : f32 to vector<8x1xf32>
    %277 = arith.addf %273, %276 : vector<8x1xf32>
    %278 = math.rsqrt %277 : vector<8x1xf32>
    %279 = vector.broadcast %278 : vector<8x1xf32> to vector<8x16xf32>
    %280 = arith.mulf %275, %279 : vector<8x16xf32>
    %281 = vector.shape_cast %160 : vector<16xf32> to vector<1x16xf32>
    %282 = vector.broadcast %281 : vector<1x16xf32> to vector<8x16xf32>
    %283 = arith.mulf %280, %282 : vector<8x16xf32>
    %284 = vector.shape_cast %162 : vector<16xf32> to vector<1x16xf32>
    %285 = vector.broadcast %284 : vector<1x16xf32> to vector<8x16xf32>
    %286 = arith.addf %283, %285 : vector<8x16xf32>
    %c1_71 = arith.constant 1 : index
    %c0_72 = arith.constant 0 : index
    %c0_73 = arith.constant 0 : index
    %287 = vector.load %arg4[%c1_71, %c0_72, %c0_73] : memref<3x16x64xf32, #tpu.memory_space<vmem>>, vector<1x16x64xf32>
    %288 = vector.shape_cast %287 : vector<1x16x64xf32> to vector<16x64xf32>
    %cst_74 = arith.constant dense<0.000000e+00> : vector<8x64xf32>
    %289 = tpu.matmul %286, %288, %cst_74 {dimension_numbers = #tpu.dot_dimension_numbers<[1], [0], [0], [1], [0, 0, 1, 1], [], []>} : vector<8x16xf32>, vector<16x64xf32>, vector<8x64xf32> -> vector<8x64xf32>
    %290 = vector.shape_cast %168 : vector<64xf32> to vector<1x64xf32>
    %291 = vector.broadcast %290 : vector<1x64xf32> to vector<8x64xf32>
    %292 = arith.addf %289, %291 : vector<8x64xf32>
    %cst_75 = arith.constant 0.000000e+00 : f32
    %293 = vector.broadcast %cst_75 : f32 to vector<8x64xf32>
    %294 = arith.maximumf %292, %293 : vector<8x64xf32>
    %c1_76 = arith.constant 1 : index
    %c0_77 = arith.constant 0 : index
    %c0_78 = arith.constant 0 : index
    %295 = vector.load %arg5[%c1_76, %c0_77, %c0_78] : memref<3x64x16xf32, #tpu.memory_space<vmem>>, vector<1x64x16xf32>
    %296 = vector.shape_cast %295 : vector<1x64x16xf32> to vector<64x16xf32>
    %cst_79 = arith.constant dense<0.000000e+00> : vector<8x16xf32>
    %297 = tpu.matmul %294, %296, %cst_79 {dimension_numbers = #tpu.dot_dimension_numbers<[1], [0], [0], [1], [0, 0, 1, 1], [], []>} : vector<8x64xf32>, vector<64x16xf32>, vector<8x16xf32> -> vector<8x16xf32>
    %298 = vector.shape_cast %166 : vector<16xf32> to vector<1x16xf32>
    %299 = vector.broadcast %298 : vector<1x16xf32> to vector<8x16xf32>
    %300 = arith.addf %297, %299 : vector<8x16xf32>
    %301 = arith.addf %262, %300 : vector<8x16xf32>
    %c14 = arith.constant 14 : index
    %c0_80 = arith.constant 0 : index
    %302 = vector.load %arg7[%c14, %c0_80] : memref<24x128xf32, #tpu.memory_space<vmem>>, vector<1x16xf32>
    %303 = vector.shape_cast %302 : vector<1x16xf32> to vector<16xf32>
    %c15 = arith.constant 15 : index
    %c0_81 = arith.constant 0 : index
    %304 = vector.load %arg7[%c15, %c0_81] : memref<24x128xf32, #tpu.memory_space<vmem>>, vector<1x16xf32>
    %305 = vector.shape_cast %304 : vector<1x16xf32> to vector<16xf32>
    %c16 = arith.constant 16 : index
    %c0_82 = arith.constant 0 : index
    %306 = vector.load %arg7[%c16, %c0_82] : memref<24x128xf32, #tpu.memory_space<vmem>>, vector<1x16xf32>
    %307 = vector.shape_cast %306 : vector<1x16xf32> to vector<16xf32>
    %c17 = arith.constant 17 : index
    %c0_83 = arith.constant 0 : index
    %308 = vector.load %arg7[%c17, %c0_83] : memref<24x128xf32, #tpu.memory_space<vmem>>, vector<1x16xf32>
    %309 = vector.shape_cast %308 : vector<1x16xf32> to vector<16xf32>
    %c18 = arith.constant 18 : index
    %c0_84 = arith.constant 0 : index
    %310 = vector.load %arg7[%c18, %c0_84] : memref<24x128xf32, #tpu.memory_space<vmem>>, vector<1x16xf32>
    %311 = vector.shape_cast %310 : vector<1x16xf32> to vector<16xf32>
    %c19 = arith.constant 19 : index
    %c0_85 = arith.constant 0 : index
    %312 = vector.load %arg7[%c19, %c0_85] : memref<24x128xf32, #tpu.memory_space<vmem>>, vector<1x16xf32>
    %313 = vector.shape_cast %312 : vector<1x16xf32> to vector<16xf32>
    %c20 = arith.constant 20 : index
    %c0_86 = arith.constant 0 : index
    %314 = vector.load %arg7[%c20, %c0_86] : memref<24x128xf32, #tpu.memory_space<vmem>>, vector<1x64xf32>
    %315 = vector.shape_cast %314 : vector<1x64xf32> to vector<64xf32>
    %cst_87 = arith.constant dense<0.000000e+00> : vector<8xf32>
    %316 = vector.multi_reduction <add>, %301, %cst_87 [1] : vector<8x16xf32> to vector<8xf32>
    %317 = vector.shape_cast %316 : vector<8xf32> to vector<8x1xf32>
    %cst_88 = arith.constant 1.600000e+01 : f32
    %318 = vector.broadcast %cst_88 : f32 to vector<8x1xf32>
    %319 = arith.divf %317, %318 : vector<8x1xf32>
    %320 = vector.broadcast %319 : vector<8x1xf32> to vector<8x16xf32>
    %321 = arith.subf %301, %320 : vector<8x16xf32>
    %322 = arith.mulf %321, %321 : vector<8x16xf32>
    %cst_89 = arith.constant dense<0.000000e+00> : vector<8xf32>
    %323 = vector.multi_reduction <add>, %322, %cst_89 [1] : vector<8x16xf32> to vector<8xf32>
    %324 = vector.shape_cast %323 : vector<8xf32> to vector<8x1xf32>
    %cst_90 = arith.constant 1.600000e+01 : f32
    %325 = vector.broadcast %cst_90 : f32 to vector<8x1xf32>
    %326 = arith.divf %324, %325 : vector<8x1xf32>
    %327 = vector.broadcast %319 : vector<8x1xf32> to vector<8x16xf32>
    %328 = arith.subf %301, %327 : vector<8x16xf32>
    %cst_91 = arith.constant 9.99999974E-6 : f32
    %329 = vector.broadcast %cst_91 : f32 to vector<8x1xf32>
    %330 = arith.addf %326, %329 : vector<8x1xf32>
    %331 = math.rsqrt %330 : vector<8x1xf32>
    %332 = vector.broadcast %331 : vector<8x1xf32> to vector<8x16xf32>
    %333 = arith.mulf %328, %332 : vector<8x16xf32>
    %334 = vector.shape_cast %303 : vector<16xf32> to vector<1x16xf32>
    %335 = vector.broadcast %334 : vector<1x16xf32> to vector<8x16xf32>
    %336 = arith.mulf %333, %335 : vector<8x16xf32>
    %337 = vector.shape_cast %305 : vector<16xf32> to vector<1x16xf32>
    %338 = vector.broadcast %337 : vector<1x16xf32> to vector<8x16xf32>
    %339 = arith.addf %336, %338 : vector<8x16xf32>
    %c2_92 = arith.constant 2 : index
    %c0_93 = arith.constant 0 : index
    %c0_94 = arith.constant 0 : index
    %340 = vector.load %arg2[%c2_92, %c0_93, %c0_94] : memref<3x16x48xf32, #tpu.memory_space<vmem>>, vector<1x16x48xf32>
    %341 = vector.shape_cast %340 : vector<1x16x48xf32> to vector<16x48xf32>
    %cst_95 = arith.constant dense<0.000000e+00> : vector<8x48xf32>
    %342 = tpu.matmul %339, %341, %cst_95 {dimension_numbers = #tpu.dot_dimension_numbers<[1], [0], [0], [1], [0, 0, 1, 1], [], []>} : vector<8x16xf32>, vector<16x48xf32>, vector<8x48xf32> -> vector<8x48xf32>
    %343 = vector.shape_cast %342 : vector<8x48xf32> to vector<1x8x48xf32>
    %344 = vector.extract_strided_slice %343 {offsets = [0, 0, 0], sizes = [1, 8, 4], strides = [1, 1, 1]} : vector<1x8x48xf32> to vector<1x8x4xf32>
    %345 = vector.extract_strided_slice %343 {offsets = [0, 0, 4], sizes = [1, 8, 4], strides = [1, 1, 1]} : vector<1x8x48xf32> to vector<1x8x4xf32>
    %346 = vector.extract_strided_slice %343 {offsets = [0, 0, 8], sizes = [1, 8, 4], strides = [1, 1, 1]} : vector<1x8x48xf32> to vector<1x8x4xf32>
    %347 = vector.extract_strided_slice %343 {offsets = [0, 0, 12], sizes = [1, 8, 4], strides = [1, 1, 1]} : vector<1x8x48xf32> to vector<1x8x4xf32>
    %348 = vector.shape_cast %344 : vector<1x8x4xf32> to vector<1x1x8x4xf32>
    %349 = vector.shape_cast %345 : vector<1x8x4xf32> to vector<1x1x8x4xf32>
    %350 = vector.shape_cast %346 : vector<1x8x4xf32> to vector<1x1x8x4xf32>
    %351 = vector.shape_cast %347 : vector<1x8x4xf32> to vector<1x1x8x4xf32>
    %352 = tpu.concatenate %348, %349, %350, %351 in 0 : vector<1x1x8x4xf32>, vector<1x1x8x4xf32>, vector<1x1x8x4xf32>, vector<1x1x8x4xf32> -> vector<4x1x8x4xf32>
    %353 = vector.shape_cast %352 : vector<4x1x8x4xf32> to vector<4x8x4xf32>
    %354 = vector.extract_strided_slice %343 {offsets = [0, 0, 16], sizes = [1, 8, 4], strides = [1, 1, 1]} : vector<1x8x48xf32> to vector<1x8x4xf32>
    %355 = vector.extract_strided_slice %343 {offsets = [0, 0, 20], sizes = [1, 8, 4], strides = [1, 1, 1]} : vector<1x8x48xf32> to vector<1x8x4xf32>
    %356 = vector.extract_strided_slice %343 {offsets = [0, 0, 24], sizes = [1, 8, 4], strides = [1, 1, 1]} : vector<1x8x48xf32> to vector<1x8x4xf32>
    %357 = vector.extract_strided_slice %343 {offsets = [0, 0, 28], sizes = [1, 8, 4], strides = [1, 1, 1]} : vector<1x8x48xf32> to vector<1x8x4xf32>
    %358 = vector.shape_cast %354 : vector<1x8x4xf32> to vector<1x1x8x4xf32>
    %359 = vector.shape_cast %355 : vector<1x8x4xf32> to vector<1x1x8x4xf32>
    %360 = vector.shape_cast %356 : vector<1x8x4xf32> to vector<1x1x8x4xf32>
    %361 = vector.shape_cast %357 : vector<1x8x4xf32> to vector<1x1x8x4xf32>
    %362 = tpu.concatenate %358, %359, %360, %361 in 0 : vector<1x1x8x4xf32>, vector<1x1x8x4xf32>, vector<1x1x8x4xf32>, vector<1x1x8x4xf32> -> vector<4x1x8x4xf32>
    %363 = vector.shape_cast %362 : vector<4x1x8x4xf32> to vector<4x8x4xf32>
    %364 = vector.extract_strided_slice %343 {offsets = [0, 0, 32], sizes = [1, 8, 4], strides = [1, 1, 1]} : vector<1x8x48xf32> to vector<1x8x4xf32>
    %365 = vector.extract_strided_slice %343 {offsets = [0, 0, 36], sizes = [1, 8, 4], strides = [1, 1, 1]} : vector<1x8x48xf32> to vector<1x8x4xf32>
    %366 = vector.extract_strided_slice %343 {offsets = [0, 0, 40], sizes = [1, 8, 4], strides = [1, 1, 1]} : vector<1x8x48xf32> to vector<1x8x4xf32>
    %367 = vector.extract_strided_slice %343 {offsets = [0, 0, 44], sizes = [1, 8, 4], strides = [1, 1, 1]} : vector<1x8x48xf32> to vector<1x8x4xf32>
    %368 = vector.shape_cast %364 : vector<1x8x4xf32> to vector<1x1x8x4xf32>
    %369 = vector.shape_cast %365 : vector<1x8x4xf32> to vector<1x1x8x4xf32>
    %370 = vector.shape_cast %366 : vector<1x8x4xf32> to vector<1x1x8x4xf32>
    %371 = vector.shape_cast %367 : vector<1x8x4xf32> to vector<1x1x8x4xf32>
    %372 = tpu.concatenate %368, %369, %370, %371 in 0 : vector<1x1x8x4xf32>, vector<1x1x8x4xf32>, vector<1x1x8x4xf32>, vector<1x1x8x4xf32> -> vector<4x1x8x4xf32>
    %373 = vector.shape_cast %372 : vector<4x1x8x4xf32> to vector<4x8x4xf32>
    "tpu.trace_start"() <{level = 10 : i32, message = "bqd,bkd->bqk"}> : () -> ()
    %cst_96 = arith.constant dense<0.000000e+00> : vector<4x8x8xf32>
    %374 = tpu.matmul %363, %353, %cst_96 {dimension_numbers = #tpu.dot_dimension_numbers<[2], [2], [1], [1], [0, 0, 0, 1, 1, 1], [0], [0]>} : vector<4x8x4xf32>, vector<4x8x4xf32>, vector<4x8x8xf32> -> vector<4x8x8xf32>
    "tpu.trace_stop"() : () -> ()
    %375 = vector.shape_cast %7 : vector<8x8xf32> to vector<1x8x8xf32>
    %376 = vector.broadcast %375 : vector<1x8x8xf32> to vector<4x8x8xf32>
    %377 = arith.addf %374, %376 : vector<4x8x8xf32>
    %cst_97 = arith.constant dense<0xFF800000> : vector<4x8xf32>
    %378 = vector.multi_reduction <maximumf>, %377, %cst_97 [2] : vector<4x8x8xf32> to vector<4x8xf32>
    %379 = vector.shape_cast %378 : vector<4x8xf32> to vector<4x8x1xf32>
    %380 = vector.broadcast %379 : vector<4x8x1xf32> to vector<4x8x8xf32>
    %381 = arith.subf %377, %380 : vector<4x8x8xf32>
    %382 = math.exp %381 : vector<4x8x8xf32>
    %cst_98 = arith.constant dense<0.000000e+00> : vector<4x8xf32>
    %383 = vector.multi_reduction <add>, %382, %cst_98 [2] : vector<4x8x8xf32> to vector<4x8xf32>
    %384 = vector.shape_cast %383 : vector<4x8xf32> to vector<4x8x1xf32>
    %385 = tpu.reciprocal %384 {approx = true} : vector<4x8x1xf32> -> vector<4x8x1xf32>
    %386 = vector.broadcast %385 : vector<4x8x1xf32> to vector<4x8x8xf32>
    %387 = arith.mulf %382, %386 : vector<4x8x8xf32>
    "tpu.trace_start"() <{level = 10 : i32, message = "bqk,bkd->bqd"}> : () -> ()
    %cst_99 = arith.constant dense<0.000000e+00> : vector<4x8x4xf32>
    %388 = tpu.matmul %387, %373, %cst_99 {dimension_numbers = #tpu.dot_dimension_numbers<[2], [1], [1], [2], [0, 0, 0, 1, 1, 2], [0], [0]>} : vector<4x8x8xf32>, vector<4x8x4xf32>, vector<4x8x4xf32> -> vector<4x8x4xf32>
    "tpu.trace_stop"() : () -> ()
    %389 = vector.shape_cast %388 : vector<4x8x4xf32> to vector<4x1x8x4xf32>
    %390 = vector.extract_strided_slice %389 {offsets = [0, 0, 0, 0], sizes = [1, 1, 8, 4], strides = [1, 1, 1, 1]} : vector<4x1x8x4xf32> to vector<1x1x8x4xf32>
    %391 = vector.shape_cast %390 : vector<1x1x8x4xf32> to vector<1x8x4xf32>
    %392 = vector.shape_cast %391 : vector<1x8x4xf32> to vector<8x4xf32>
    %393 = vector.extract_strided_slice %389 {offsets = [1, 0, 0, 0], sizes = [1, 1, 8, 4], strides = [1, 1, 1, 1]} : vector<4x1x8x4xf32> to vector<1x1x8x4xf32>
    %394 = vector.shape_cast %393 : vector<1x1x8x4xf32> to vector<1x8x4xf32>
    %395 = vector.shape_cast %394 : vector<1x8x4xf32> to vector<8x4xf32>
    %396 = vector.extract_strided_slice %389 {offsets = [2, 0, 0, 0], sizes = [1, 1, 8, 4], strides = [1, 1, 1, 1]} : vector<4x1x8x4xf32> to vector<1x1x8x4xf32>
    %397 = vector.shape_cast %396 : vector<1x1x8x4xf32> to vector<1x8x4xf32>
    %398 = vector.shape_cast %397 : vector<1x8x4xf32> to vector<8x4xf32>
    %399 = vector.extract_strided_slice %389 {offsets = [3, 0, 0, 0], sizes = [1, 1, 8, 4], strides = [1, 1, 1, 1]} : vector<4x1x8x4xf32> to vector<1x1x8x4xf32>
    %400 = vector.shape_cast %399 : vector<1x1x8x4xf32> to vector<1x8x4xf32>
    %401 = vector.shape_cast %400 : vector<1x8x4xf32> to vector<8x4xf32>
    %402 = tpu.concatenate %392, %395, %398, %401 in 1 : vector<8x4xf32>, vector<8x4xf32>, vector<8x4xf32>, vector<8x4xf32> -> vector<8x16xf32>
    %c2_100 = arith.constant 2 : index
    %c0_101 = arith.constant 0 : index
    %c0_102 = arith.constant 0 : index
    %403 = vector.load %arg3[%c2_100, %c0_101, %c0_102] : memref<3x16x16xf32, #tpu.memory_space<vmem>>, vector<1x16x16xf32>
    %404 = vector.shape_cast %403 : vector<1x16x16xf32> to vector<16x16xf32>
    %cst_103 = arith.constant dense<0.000000e+00> : vector<8x16xf32>
    %405 = tpu.matmul %402, %404, %cst_103 {dimension_numbers = #tpu.dot_dimension_numbers<[1], [0], [0], [1], [0, 0, 1, 1], [], []>} : vector<8x16xf32>, vector<16x16xf32>, vector<8x16xf32> -> vector<8x16xf32>
    %406 = arith.addf %301, %405 : vector<8x16xf32>
    %407 = vector.shape_cast %311 : vector<16xf32> to vector<1x16xf32>
    %408 = vector.broadcast %407 : vector<1x16xf32> to vector<8x16xf32>
    %409 = arith.addf %406, %408 : vector<8x16xf32>
    %cst_104 = arith.constant dense<0.000000e+00> : vector<8xf32>
    %410 = vector.multi_reduction <add>, %409, %cst_104 [1] : vector<8x16xf32> to vector<8xf32>
    %411 = vector.shape_cast %410 : vector<8xf32> to vector<8x1xf32>
    %cst_105 = arith.constant 1.600000e+01 : f32
    %412 = vector.broadcast %cst_105 : f32 to vector<8x1xf32>
    %413 = arith.divf %411, %412 : vector<8x1xf32>
    %414 = vector.broadcast %413 : vector<8x1xf32> to vector<8x16xf32>
    %415 = arith.subf %409, %414 : vector<8x16xf32>
    %416 = arith.mulf %415, %415 : vector<8x16xf32>
    %cst_106 = arith.constant dense<0.000000e+00> : vector<8xf32>
    %417 = vector.multi_reduction <add>, %416, %cst_106 [1] : vector<8x16xf32> to vector<8xf32>
    %418 = vector.shape_cast %417 : vector<8xf32> to vector<8x1xf32>
    %cst_107 = arith.constant 1.600000e+01 : f32
    %419 = vector.broadcast %cst_107 : f32 to vector<8x1xf32>
    %420 = arith.divf %418, %419 : vector<8x1xf32>
    %421 = vector.broadcast %413 : vector<8x1xf32> to vector<8x16xf32>
    %422 = arith.subf %409, %421 : vector<8x16xf32>
    %cst_108 = arith.constant 9.99999974E-6 : f32
    %423 = vector.broadcast %cst_108 : f32 to vector<8x1xf32>
    %424 = arith.addf %420, %423 : vector<8x1xf32>
    %425 = math.rsqrt %424 : vector<8x1xf32>
    %426 = vector.broadcast %425 : vector<8x1xf32> to vector<8x16xf32>
    %427 = arith.mulf %422, %426 : vector<8x16xf32>
    %428 = vector.shape_cast %307 : vector<16xf32> to vector<1x16xf32>
    %429 = vector.broadcast %428 : vector<1x16xf32> to vector<8x16xf32>
    %430 = arith.mulf %427, %429 : vector<8x16xf32>
    %431 = vector.shape_cast %309 : vector<16xf32> to vector<1x16xf32>
    %432 = vector.broadcast %431 : vector<1x16xf32> to vector<8x16xf32>
    %433 = arith.addf %430, %432 : vector<8x16xf32>
    %c2_109 = arith.constant 2 : index
    %c0_110 = arith.constant 0 : index
    %c0_111 = arith.constant 0 : index
    %434 = vector.load %arg4[%c2_109, %c0_110, %c0_111] : memref<3x16x64xf32, #tpu.memory_space<vmem>>, vector<1x16x64xf32>
    %435 = vector.shape_cast %434 : vector<1x16x64xf32> to vector<16x64xf32>
    %cst_112 = arith.constant dense<0.000000e+00> : vector<8x64xf32>
    %436 = tpu.matmul %433, %435, %cst_112 {dimension_numbers = #tpu.dot_dimension_numbers<[1], [0], [0], [1], [0, 0, 1, 1], [], []>} : vector<8x16xf32>, vector<16x64xf32>, vector<8x64xf32> -> vector<8x64xf32>
    %437 = vector.shape_cast %315 : vector<64xf32> to vector<1x64xf32>
    %438 = vector.broadcast %437 : vector<1x64xf32> to vector<8x64xf32>
    %439 = arith.addf %436, %438 : vector<8x64xf32>
    %cst_113 = arith.constant 0.000000e+00 : f32
    %440 = vector.broadcast %cst_113 : f32 to vector<8x64xf32>
    %441 = arith.maximumf %439, %440 : vector<8x64xf32>
    %c2_114 = arith.constant 2 : index
    %c0_115 = arith.constant 0 : index
    %c0_116 = arith.constant 0 : index
    %442 = vector.load %arg5[%c2_114, %c0_115, %c0_116] : memref<3x64x16xf32, #tpu.memory_space<vmem>>, vector<1x64x16xf32>
    %443 = vector.shape_cast %442 : vector<1x64x16xf32> to vector<64x16xf32>
    %cst_117 = arith.constant dense<0.000000e+00> : vector<8x16xf32>
    %444 = tpu.matmul %441, %443, %cst_117 {dimension_numbers = #tpu.dot_dimension_numbers<[1], [0], [0], [1], [0, 0, 1, 1], [], []>} : vector<8x64xf32>, vector<64x16xf32>, vector<8x16xf32> -> vector<8x16xf32>
    %445 = vector.shape_cast %313 : vector<16xf32> to vector<1x16xf32>
    %446 = vector.broadcast %445 : vector<1x16xf32> to vector<8x16xf32>
    %447 = arith.addf %444, %446 : vector<8x16xf32>
    %448 = arith.addf %409, %447 : vector<8x16xf32>
    %c21 = arith.constant 21 : index
    %c0_118 = arith.constant 0 : index
    %449 = vector.load %arg7[%c21, %c0_118] : memref<24x128xf32, #tpu.memory_space<vmem>>, vector<1x16xf32>
    %450 = vector.shape_cast %449 : vector<1x16xf32> to vector<16xf32>
    %c22 = arith.constant 22 : index
    %c0_119 = arith.constant 0 : index
    %451 = vector.load %arg7[%c22, %c0_119] : memref<24x128xf32, #tpu.memory_space<vmem>>, vector<1x16xf32>
    %452 = vector.shape_cast %451 : vector<1x16xf32> to vector<16xf32>
    %c23 = arith.constant 23 : index
    %c0_120 = arith.constant 0 : index
    %453 = vector.load %arg7[%c23, %c0_120] : memref<24x128xf32, #tpu.memory_space<vmem>>, vector<1x128xf32>
    %454 = vector.shape_cast %453 : vector<1x128xf32> to vector<128xf32>
    %cst_121 = arith.constant dense<0.000000e+00> : vector<8xf32>
    %455 = vector.multi_reduction <add>, %448, %cst_121 [1] : vector<8x16xf32> to vector<8xf32>
    %456 = vector.shape_cast %455 : vector<8xf32> to vector<8x1xf32>
    %cst_122 = arith.constant 1.600000e+01 : f32
    %457 = vector.broadcast %cst_122 : f32 to vector<8x1xf32>
    %458 = arith.divf %456, %457 : vector<8x1xf32>
    %459 = vector.broadcast %458 : vector<8x1xf32> to vector<8x16xf32>
    %460 = arith.subf %448, %459 : vector<8x16xf32>
    %461 = arith.mulf %460, %460 : vector<8x16xf32>
    %cst_123 = arith.constant dense<0.000000e+00> : vector<8xf32>
    %462 = vector.multi_reduction <add>, %461, %cst_123 [1] : vector<8x16xf32> to vector<8xf32>
    %463 = vector.shape_cast %462 : vector<8xf32> to vector<8x1xf32>
    %cst_124 = arith.constant 1.600000e+01 : f32
    %464 = vector.broadcast %cst_124 : f32 to vector<8x1xf32>
    %465 = arith.divf %463, %464 : vector<8x1xf32>
    %466 = vector.broadcast %458 : vector<8x1xf32> to vector<8x16xf32>
    %467 = arith.subf %448, %466 : vector<8x16xf32>
    %cst_125 = arith.constant 9.99999974E-6 : f32
    %468 = vector.broadcast %cst_125 : f32 to vector<8x1xf32>
    %469 = arith.addf %465, %468 : vector<8x1xf32>
    %470 = math.rsqrt %469 : vector<8x1xf32>
    %471 = vector.broadcast %470 : vector<8x1xf32> to vector<8x16xf32>
    %472 = arith.mulf %467, %471 : vector<8x16xf32>
    %473 = vector.shape_cast %450 : vector<16xf32> to vector<1x16xf32>
    %474 = vector.broadcast %473 : vector<1x16xf32> to vector<8x16xf32>
    %475 = arith.mulf %472, %474 : vector<8x16xf32>
    %476 = vector.shape_cast %452 : vector<16xf32> to vector<1x16xf32>
    %477 = vector.broadcast %476 : vector<1x16xf32> to vector<8x16xf32>
    %478 = arith.addf %475, %477 : vector<8x16xf32>
    %c0_126 = arith.constant 0 : index
    %c0_127 = arith.constant 0 : index
    %479 = vector.load %arg6[%c0_126, %c0_127] : memref<16x128xf32, #tpu.memory_space<vmem>>, vector<16x128xf32>
    %cst_128 = arith.constant dense<0.000000e+00> : vector<8x128xf32>
    %480 = tpu.matmul %478, %479, %cst_128 {dimension_numbers = #tpu.dot_dimension_numbers<[1], [0], [0], [1], [0, 0, 1, 1], [], []>} : vector<8x16xf32>, vector<16x128xf32>, vector<8x128xf32> -> vector<8x128xf32>
    %481 = vector.shape_cast %454 : vector<128xf32> to vector<1x128xf32>
    %482 = vector.broadcast %481 : vector<1x128xf32> to vector<8x128xf32>
    %483 = arith.addf %480, %482 : vector<8x128xf32>
    %484 = vector.shape_cast %483 : vector<8x128xf32> to vector<1x8x128xf32>
    %c0_129 = arith.constant 0 : index
    %c0_130 = arith.constant 0 : index
    %c0_131 = arith.constant 0 : index
    %485 = vector.load %arg8[%c0_129, %c0_130, %c0_131] : memref<1x8x128xf32, #tpu.memory_space<vmem>>, vector<1x8x128xf32>
    tpu.vector_store %arg8[%c0_129, %c0_130, %c0_131], %484 {strides = array<i32>} : memref<1x8x128xf32, #tpu.memory_space<vmem>>, vector<1x8x128xf32>,
    return
  }
  func.func @transform_0(%arg0: i32) -> (i32, i32, i32) {
    %c0_i32 = arith.constant 0 : i32
    %c0_i32_0 = arith.constant 0 : i32
    %c0_i32_1 = arith.constant 0 : i32
    return %arg0, %c0_i32, %c0_i32_0 : i32, i32, i32
  }
  func.func @transform_1(%arg0: i32) -> (i32, i32, i32) {
    %c0_i32 = arith.constant 0 : i32
    %c0_i32_0 = arith.constant 0 : i32
    %c0_i32_1 = arith.constant 0 : i32
    %c0_i32_2 = arith.constant 0 : i32
    return %c0_i32, %c0_i32_0, %c0_i32_1 : i32, i32, i32
  }
  func.func @transform_2(%arg0: i32) -> (i32, i32, i32) {
    %c0_i32 = arith.constant 0 : i32
    %c0_i32_0 = arith.constant 0 : i32
    %c0_i32_1 = arith.constant 0 : i32
    %c0_i32_2 = arith.constant 0 : i32
    return %c0_i32, %c0_i32_0, %c0_i32_1 : i32, i32, i32
  }
  func.func @transform_3(%arg0: i32) -> (i32, i32, i32) {
    %c0_i32 = arith.constant 0 : i32
    %c0_i32_0 = arith.constant 0 : i32
    %c0_i32_1 = arith.constant 0 : i32
    %c0_i32_2 = arith.constant 0 : i32
    return %c0_i32, %c0_i32_0, %c0_i32_1 : i32, i32, i32
  }
  func.func @transform_4(%arg0: i32) -> (i32, i32, i32) {
    %c0_i32 = arith.constant 0 : i32
    %c0_i32_0 = arith.constant 0 : i32
    %c0_i32_1 = arith.constant 0 : i32
    %c0_i32_2 = arith.constant 0 : i32
    return %c0_i32, %c0_i32_0, %c0_i32_1 : i32, i32, i32
  }
  func.func @transform_5(%arg0: i32) -> (i32, i32) {
    %c0_i32 = arith.constant 0 : i32
    %c0_i32_0 = arith.constant 0 : i32
    %c0_i32_1 = arith.constant 0 : i32
    return %c0_i32, %c0_i32_0 : i32, i32
  }
  func.func @transform_6(%arg0: i32) -> (i32, i32) {
    %c0_i32 = arith.constant 0 : i32
    %c0_i32_0 = arith.constant 0 : i32
    %c0_i32_1 = arith.constant 0 : i32
    return %c0_i32, %c0_i32_0 : i32, i32
  }
  func.func @transform_7(%arg0: i32) -> (i32, i32, i32) {
    %c0_i32 = arith.constant 0 : i32
    %c0_i32_0 = arith.constant 0 : i32
    %c0_i32_1 = arith.constant 0 : i32
    return %arg0, %c0_i32, %c0_i32_0 : i32, i32, i32
  }
}

</mosaic_0001>

<llo_original>
// kernel: bigram_lm_forward.1
$region0: #{bigram_lm_forward.1}
  #allocation0 [shape = 'u32[]', space=smem, size = 0x4, offset = 0x4, fixed_abs, tag = 'smem constant byte address 0x4 - core index']
  #allocation1 [shape = 'u32[72,128]{1,0:T(1,128)}', space=vmem, size = 0x9000, scoped, tag = 'internal scratch']
  %s0 = inlined_call_operand.vmem [shape: f32[2,8,16], index: 0, kind: input, shape index: {}]
  %s1 = inlined_call_operand.vmem [shape: f32[3,16,48], index: 1, kind: input, shape index: {}]
  %s2 = inlined_call_operand.vmem [shape: f32[3,16,16], index: 2, kind: input, shape index: {}]
  %s3 = inlined_call_operand.vmem [shape: f32[3,16,64], index: 3, kind: input, shape index: {}]
  %s4 = inlined_call_operand.vmem [shape: f32[3,64,16], index: 4, kind: input, shape index: {}]
  %s5 = inlined_call_operand.vmem [shape: f32[16,128], index: 5, kind: input, shape index: {}]
  %s6 = inlined_call_operand.vmem [shape: f32[24,128], index: 6, kind: input, shape index: {}]
  %s7 = inlined_call_operand.hbm [shape: f32[2,8,128], index: 7, kind: output, shape index: {}]
  %s8 = sld [smem:[#allocation0]]
  $region61: #{bigram_lm_forward.1} parent=0
    _
  %s10 = ssub.s32 1, %s8
  %s11 = scalar_select 0, %s10, %s8
  $region1: #{bigram_lm_forward.1} parent=0
    #allocation2 [shape = 'u8[8192]{0}', space=vmem, size = 0x2000, scoped, tag = 'output window, operand 0']
    #allocation3 [shape = 's32[2]{0}', space=sflag, size = 0x8, scoped, tag = 'scoped memory for bigram_lm_forward.1']
    %12 = vsyncpa [#allocation3], 0
    %s13 = scalar_lea.sflag [#allocation3], 1
    %14 = vsyncpa %s13, 0
    loop: start=0, step=1, limit=4
    $region2: #{bigram_lm_forward.1} parent=1 // loop_pre_header
      _
    $region3: #{bigram_lm_forward.1} parent=1 // loop_header
      %s16 = sphi 0, %s20
      %p17 = scmp.ge.s32.totalorder %s16, 4
      %s26 = sphi 0, %s28
      %s29 = sphi 0, %s26
      %s30 = sphi 0, %s29
      %s46 = sphi 0, %s30
      %s50 = sphi 0, %s50
      %s52 = sphi 0, %s50
      %s53 = sphi 0, %s52
      %s67 = sphi 0, %s53
      %s71 = sphi 0, %s71
      %s73 = sphi 0, %s71
      %s74 = sphi 0, %s73
      %s88 = sphi 0, %s74
      %s92 = sphi 0, %s92
      %s94 = sphi 0, %s92
      %s95 = sphi 0, %s94
      %s109 = sphi 0, %s95
      %s113 = sphi 0, %s113
      %s115 = sphi 0, %s113
      %s116 = sphi 0, %s115
      %s130 = sphi 0, %s116
      %s134 = sphi 0, %s134
      %s136 = sphi 0, %s134
      %s137 = sphi 0, %s136
      %s151 = sphi 0, %s137
      %s155 = sphi 0, %s155
      %s157 = sphi 0, %s155
      %s158 = sphi 0, %s157
      %s172 = sphi 0, %s158
      %s178 = sphi 0, %s180
      %s181 = sphi 0, %s178
      %s182 = sphi 0, %s181
      %s198 = sphi 0, %s182
    $region4: #{bigram_lm_forward.1} parent=1 // loop_header_branch
      %19 = sbr.rel (%p17) target = $region8
    $region5: #{bigram_lm_forward.1} parent=1 // loop_body
      %s21 = ssub.s32 %s16, 1
      %s22 = ssub.s32 %s16, 2
      %s23 = sadd.s32 %s16, 1
      %s24 = ssub.s32 %s16, %s23
      %p25 = scmp.eq.s32.totalorder %s24, 0
      %s27 = sadd.s32 %s26, 1
      %s28 = scalar_select %p25, %s26, %s27
      %p31 = pneg %p25
      %p32 = scmp.eq.s32.totalorder %s16, 1
      %p33 = por %p31, %p32
      %p34 = scmp.ne.s32.totalorder %s26, %s29
      %p35 = scmp.eq.s32.totalorder %s16, 0
      %p36 = por %p34, %p35
      %p37 = scmp.ne.s32.totalorder %s26, %s29
      %p38 = scmp.eq.s32.totalorder %s21, 1
      %p39 = por %p37, %p38
      %p40 = scmp.ne.s32.totalorder %s29, %s30
      %p41 = scmp.eq.s32.totalorder %s21, 0
      %p42 = por %p40, %p41
      %p43 = scmp.ne.s32.totalorder %s29, %s30
      %p44 = scmp.eq.s32.totalorder %s22, 1
      %p45 = por %p43, %p44
      %p47 = scmp.ne.s32.totalorder %s30, %s46
      %p48 = scmp.eq.s32.totalorder %s22, 0
      %p49 = por %p47, %p48
      %s51 = sadd.s32 %s50, 1
      %p54 = scmp.eq.s32.totalorder %s16, 1
      %p55 = scmp.ne.s32.totalorder %s50, %s52
      %p56 = scmp.eq.s32.totalorder %s16, 0
      %p57 = por %p55, %p56
      %p58 = scmp.ne.s32.totalorder %s50, %s52
      %p59 = scmp.eq.s32.totalorder %s21, 1
      %p60 = por %p58, %p59
      %p61 = scmp.ne.s32.totalorder %s52, %s53
      %p62 = scmp.eq.s32.totalorder %s21, 0
      %p63 = por %p61, %p62
      %p64 = scmp.ne.s32.totalorder %s52, %s53
      %p65 = scmp.eq.s32.totalorder %s22, 1
      %p66 = por %p64, %p65
      %p68 = scmp.ne.s32.totalorder %s53, %s67
      %p69 = scmp.eq.s32.totalorder %s22, 0
      %p70 = por %p68, %p69
      %s72 = sadd.s32 %s71, 1
      %p75 = scmp.eq.s32.totalorder %s16, 1
      %p76 = scmp.ne.s32.totalorder %s71, %s73
      %p77 = scmp.eq.s32.totalorder %s16, 0
      %p78 = por %p76, %p77
      %p79 = scmp.ne.s32.totalorder %s71, %s73
      %p80 = scmp.eq.s32.totalorder %s21, 1
      %p81 = por %p79, %p80
      %p82 = scmp.ne.s32.totalorder %s73, %s74
      %p83 = scmp.eq.s32.totalorder %s21, 0
      %p84 = por %p82, %p83
      %p85 = scmp.ne.s32.totalorder %s73, %s74
      %p86 = scmp.eq.s32.totalorder %s22, 1
      %p87 = por %p85, %p86
      %p89 = scmp.ne.s32.totalorder %s74, %s88
      %p90 = scmp.eq.s32.totalorder %s22, 0
      %p91 = por %p89, %p90
      %s93 = sadd.s32 %s92, 1
      %p96 = scmp.eq.s32.totalorder %s16, 1
      %p97 = scmp.ne.s32.totalorder %s92, %s94
      %p98 = scmp.eq.s32.totalorder %s16, 0
      %p99 = por %p97, %p98
      %p100 = scmp.ne.s32.totalorder %s92, %s94
      %p101 = scmp.eq.s32.totalorder %s21, 1
      %p102 = por %p100, %p101
      %p103 = scmp.ne.s32.totalorder %s94, %s95
      %p104 = scmp.eq.s32.totalorder %s21, 0
      %p105 = por %p103, %p104
      %p106 = scmp.ne.s32.totalorder %s94, %s95
      %p107 = scmp.eq.s32.totalorder %s22, 1
      %p108 = por %p106, %p107
      %p110 = scmp.ne.s32.totalorder %s95, %s109
      %p111 = scmp.eq.s32.totalorder %s22, 0
      %p112 = por %p110, %p111
      %s114 = sadd.s32 %s113, 1
      %p117 = scmp.eq.s32.totalorder %s16, 1
      %p118 = scmp.ne.s32.totalorder %s113, %s115
      %p119 = scmp.eq.s32.totalorder %s16, 0
      %p120 = por %p118, %p119
      %p121 = scmp.ne.s32.totalorder %s113, %s115
      %p122 = scmp.eq.s32.totalorder %s21, 1
      %p123 = por %p121, %p122
      %p124 = scmp.ne.s32.totalorder %s115, %s116
      %p125 = scmp.eq.s32.totalorder %s21, 0
      %p126 = por %p124, %p125
      %p127 = scmp.ne.s32.totalorder %s115, %s116
      %p128 = scmp.eq.s32.totalorder %s22, 1
      %p129 = por %p127, %p128
      %p131 = scmp.ne.s32.totalorder %s116, %s130
      %p132 = scmp.eq.s32.totalorder %s22, 0
      %p133 = por %p131, %p132
      %s135 = sadd.s32 %s134, 1
      %p138 = scmp.eq.s32.totalorder %s16, 1
      %p139 = scmp.ne.s32.totalorder %s134, %s136
      %p140 = scmp.eq.s32.totalorder %s16, 0
      %p141 = por %p139, %p140
      %p142 = scmp.ne.s32.totalorder %s134, %s136
      %p143 = scmp.eq.s32.totalorder %s21, 1
      %p144 = por %p142, %p143
      %p145 = scmp.ne.s32.totalorder %s136, %s137
      %p146 = scmp.eq.s32.totalorder %s21, 0
      %p147 = por %p145, %p146
      %p148 = scmp.ne.s32.totalorder %s136, %s137
      %p149 = scmp.eq.s32.totalorder %s22, 1
      %p150 = por %p148, %p149
      %p152 = scmp.ne.s32.totalorder %s137, %s151
      %p153 = scmp.eq.s32.totalorder %s22, 0
      %p154 = por %p152, %p153
      %s156 = sadd.s32 %s155, 1
      %p159 = scmp.eq.s32.totalorder %s16, 1
      %p160 = scmp.ne.s32.totalorder %s155, %s157
      %p161 = scmp.eq.s32.totalorder %s16, 0
      %p162 = por %p160, %p161
      %p163 = scmp.ne.s32.totalorder %s155, %s157
      %p164 = scmp.eq.s32.totalorder %s21, 1
      %p165 = por %p163, %p164
      %p166 = scmp.ne.s32.totalorder %s157, %s158
      %p167 = scmp.eq.s32.totalorder %s21, 0
      %p168 = por %p166, %p167
      %p169 = scmp.ne.s32.totalorder %s157, %s158
      %p170 = scmp.eq.s32.totalorder %s22, 1
      %p171 = por %p169, %p170
      %p173 = scmp.ne.s32.totalorder %s158, %s172
      %p174 = scmp.eq.s32.totalorder %s22, 0
      %p175 = por %p173, %p174
      %s176 = ssub.s32 %s16, %s23
      %p177 = scmp.eq.s32.totalorder %s176, 0
      %s179 = sadd.s32 %s178, 1
      %s180 = scalar_select %p177, %s178, %s179
      %p183 = pneg %p177
      %p184 = scmp.eq.s32.totalorder %s16, 1
      %p185 = por %p183, %p184
      %p186 = scmp.ne.s32.totalorder %s178, %s181
      %p187 = scmp.eq.s32.totalorder %s16, 0
      %p188 = por %p186, %p187
      %p189 = scmp.ne.s32.totalorder %s178, %s181
      %p190 = scmp.eq.s32.totalorder %s21, 1
      %p191 = por %p189, %p190
      %p192 = scmp.ne.s32.totalorder %s181, %s182
      %p193 = scmp.eq.s32.totalorder %s21, 0
      %p194 = por %p192, %p193
      %p195 = scmp.ne.s32.totalorder %s181, %s182
      %p196 = scmp.eq.s32.totalorder %s22, 1
      %p197 = por %p195, %p196
      %p199 = scmp.ne.s32.totalorder %s182, %s198
      %p200 = scmp.eq.s32.totalorder %s22, 0
      %p201 = por %p199, %p200
      %p202 = scmp.le.s32.totalorder 1, %s16
      %p203 = scmp.lt.s32.totalorder %s16, 3
      %p204 = pnand %p202, %p203
      %p205 = pneg %p204
      // Predicated region
      $region9: #{bigram_lm_forward.1} parent=5 // pred_check
        _
      $region10: #{bigram_lm_forward.1} parent=5 // pred_check_branch
        %207 = sbr.rel (%p204) target = $region12
      $region11: #{bigram_lm_forward.1} parent=5 // pred_region
        %s208 = ssub.s32 %s16, 1
        // Predicated region
        $region13: #{bigram_lm_forward.1} parent=11 // pred_check
          %p209 = pneg %p63
        $region14: #{bigram_lm_forward.1} parent=11 // pred_check_branch
          %211 = sbr.rel (%p209) target = $region16
        $region15: #{bigram_lm_forward.1} parent=11 // pred_region
          _
        $region16: #{bigram_lm_forward.1} parent=11 // pred_fallthru
          _
        // Predicated region
        $region17: #{bigram_lm_forward.1} parent=11 // pred_check
          %p212 = pneg %p84
        $region18: #{bigram_lm_forward.1} parent=11 // pred_check_branch
          %214 = sbr.rel (%p212) target = $region20
        $region19: #{bigram_lm_forward.1} parent=11 // pred_region
          _
        $region20: #{bigram_lm_forward.1} parent=11 // pred_fallthru
          _
        // Predicated region
        $region21: #{bigram_lm_forward.1} parent=11 // pred_check
          %p215 = pneg %p105
        $region22: #{bigram_lm_forward.1} parent=11 // pred_check_branch
          %217 = sbr.rel (%p215) target = $region24
        $region23: #{bigram_lm_forward.1} parent=11 // pred_region
          _
        $region24: #{bigram_lm_forward.1} parent=11 // pred_fallthru
          _
        // Predicated region
        $region25: #{bigram_lm_forward.1} parent=11 // pred_check
          %p218 = pneg %p126
        $region26: #{bigram_lm_forward.1} parent=11 // pred_check_branch
          %220 = sbr.rel (%p218) target = $region28
        $region27: #{bigram_lm_forward.1} parent=11 // pred_region
          _
        $region28: #{bigram_lm_forward.1} parent=11 // pred_fallthru
          _
        // Predicated region
        $region29: #{bigram_lm_forward.1} parent=11 // pred_check
          %p221 = pneg %p147
        $region30: #{bigram_lm_forward.1} parent=11 // pred_check_branch
          %223 = sbr.rel (%p221) target = $region32
        $region31: #{bigram_lm_forward.1} parent=11 // pred_region
          _
        $region32: #{bigram_lm_forward.1} parent=11 // pred_fallthru
          _
        // Predicated region
        $region33: #{bigram_lm_forward.1} parent=11 // pred_check
          %p224 = pneg %p168
        $region34: #{bigram_lm_forward.1} parent=11 // pred_check_branch
          %226 = sbr.rel (%p224) target = $region36
        $region35: #{bigram_lm_forward.1} parent=11 // pred_region
          _
        $region36: #{bigram_lm_forward.1} parent=11 // pred_fallthru
          _
      $region12: #{bigram_lm_forward.1} parent=5 // pred_fallthru
        _
      %p227 = scmp.lt.s32.totalorder %s16, 2
      // Predicated region
      $region37: #{bigram_lm_forward.1} parent=5 // pred_check
        %p228 = pneg %p227
      $region38: #{bigram_lm_forward.1} parent=5 // pred_check_branch
        %230 = sbr.rel (%p228) target = $region40
      $region39: #{bigram_lm_forward.1} parent=5 // pred_region
        // Predicated region
        $region41: #{bigram_lm_forward.1} parent=39 // pred_check
          %p231 = pneg %p36
        $region42: #{bigram_lm_forward.1} parent=39 // pred_check_branch
          %233 = sbr.rel (%p231) target = $region44
        $region43: #{bigram_lm_forward.1} parent=39 // pred_region
          %p234 = scmp.lt.s32.totalorder %s16, 1
          %s235 = scalar_select %p234, %s16, 1
          %s236 = smul.addr %s235, 8
          %s237 = scalar_lea.vmem %s0, %s236
        $region44: #{bigram_lm_forward.1} parent=39 // pred_fallthru
          _
      $region40: #{bigram_lm_forward.1} parent=5 // pred_fallthru
        _
      %p238 = scmp.le.s32.totalorder 1, %s16
      %p239 = scmp.lt.s32.totalorder %s16, 3
      %p240 = pnand %p238, %p239
      %p241 = pneg %p240
      // Predicated region
      $region45: #{bigram_lm_forward.1} parent=5 // pred_check
        _
      $region46: #{bigram_lm_forward.1} parent=5 // pred_check_branch
        %243 = sbr.rel (%p240) target = $region48
      $region47: #{bigram_lm_forward.1} parent=5 // pred_region
        %s244 = ssub.s32 %s16, 1
        %p245 = scmp.lt.s32.totalorder %s21, 1
        %s246 = scalar_select %p245, %s21, 1
        %s247 = smul.addr %s246, 8
        %s248 = scalar_lea.vmem %s0, %s247
        %p249 = pneg %p42
        %p250 = pneg %p39
        %p251 = pneg %p63
        %p252 = pneg %p60
        %p253 = pneg %p84
        %p254 = pneg %p81
        %p255 = pneg %p105
        %p256 = pneg %p102
        %p257 = pneg %p126
        %p258 = pneg %p123
        %p259 = pneg %p147
        %p260 = pneg %p144
        %p261 = pneg %p168
        %p262 = pneg %p165
        %p263 = pneg %p194
        %p264 = pneg %p191
        %s265 = sand.u32 %s181, 1
        %s266 = scalar_lea.sflag [#allocation3], %s265
        %s267 = sand.u32 %s181, 1
        %s268 = smul.addr %s267, 8
        %s269 = scalar_lea.vmem [#allocation2], %s268
        %p270 = scmp.lt.s32.totalorder %s21, 1
        %s271 = scalar_select %p270, %s21, 1
        %s272 = smul.addr %s271, 8
        %s273 = scalar_lea.vmem %s0, %s272
        %v274 = vld [vmem:[%s273] sm:$0xff]
        %v275 = vlaneseq
        %v276 = vshrl.u32 %v275, 7
        %v277 = vlaneseq
        %v278 = vand.u32 %v277, 127
        %vm279 = vcmp.le.s32.totalorder %v278, %v276
        %v280 = vsel %vm279, 0.0, -1e+30
        %v281 = vld [vmem:[%s6] sm:$0x1]
        %v282 = vld [vmem:[%s6 + $0x1] sm:$0x1]
        %v283 = vld [vmem:[%s6 + $0x2] sm:$0x1]
        %v284 = vld [vmem:[%s6 + $0x3] sm:$0x1]
        %v285 = vld [vmem:[%s6 + $0x4] sm:$0x1]
        %v286 = vld [vmem:[%s6 + $0x5] sm:$0x1]
        %v287 = vld [vmem:[%s6 + $0x6] sm:$0x1]
        %vm288 = vcmask 130048
        %v289 = vsel %vm288, %v274, 0.0
        %290 = vadd.xlane.f32.xlu0 %v289
        %v291 = vpop.xlane.xlu0 %290
        %v292 = vrcp.pop 16.0
        %v293 = vmul.f32 16.0, %v292
        %v294 = vsub.f32 1.0, %v293
        %v295 = vmul.f32 %v292, %v294
        %v296 = vadd.f32 %v292, %v295
        %vm297 = vweird.f32 %v292
        %v298 = vsel %vm297, %v292, %v296
        %v299 = vmul.f32 %v291, %v298
        %v300 = vsub.f32 %v274, %v299
        %v301 = vmul.f32 %v300, %v300
        %v302 = vsel %vm288, %v301, 0.0
        %303 = vadd.xlane.f32.xlu0 %v302
        %v304 = vpop.xlane.xlu0 %303
        %v305 = vmul.f32 %v304, %v298
        %v306 = vadd.f32 %v305, 1e-05
        %v307 = vrsqrt.pop %v306
        %v308 = vmul.f32 %v307, %v306
        %v309 = vmul.f32 %v308, %v307
        %v310 = vmul.f32 0.5, %v309
        %v311 = vsub.f32 1.5, %v310
        %v312 = vmul.f32 %v307, %v311
        %vm313 = vweird.f32 %v306
        %vm314 = vweird.f32 %v307
        %vm315 = vmor %vm313, %vm314
        %v316 = vsel %vm315, %v307, %v312
        %v317 = vmul.f32 %v300, %v316
        %v318 = vperm.slane %v281, 0
        %v319 = vmul.f32 %v317, %v318
        %v320 = vperm.slane %v282, 0
        %v321 = vadd.f32 %v319, %v320
        %v322 = vld [vmem:[%s1] sm:$0xff]
        %v323 = vld [vmem:[%s1 + $0x8] sm:$0xff]
        %v325 = vsel %vm288, %v321, 0
        %327 = vmatpush.msra.mxu0 0.0
        %328 = vmatpush.msra.mxu0 0.0
        %329 = vmatpush.msra.mxu0 0.0
        %330 = vmatpush.msra.mxu0 0.0
        %331 = vmatpush.msra.mxu0 0.0
        %332 = vmatpush.msra.mxu0 0.0
        %333 = vmatpush.msra.mxu0 0.0
        %334 = vmatpush.msra.mxu0 0.0
        %335 = vmatpush.msra.mxu0 0.0
        %336 = vmatpush.msra.mxu0 0.0
        %337 = vmatpush.msra.mxu0 0.0
        %338 = vmatpush.msra.mxu0 0.0
        %339 = vmatpush.msra.mxu0 0.0
        %340 = vmatpush.msra.mxu0 0.0
        %341 = vmatpush.msra.mxu0 %v323
        %342 = vmatpush.msra.mxu0 %v322
        %343 = vmatmul.f32.gmra.mxu0 %v325
        %v344 = vpop.f32.mrf.mxu0
        %v345 = vadd.f32 0.0, %v344
        %346 = vdwg.mxu0
        %348 = vrot.lane.b32.xlu0 %v345, 124
        %v349 = vpop.permute.xlu0 %348
        %350 = vrot.lane.b32.xlu0 %v345, 120
        %v351 = vpop.permute.xlu0 %350
        %352 = vrot.lane.b32.xlu0 %v345, 116
        %v353 = vpop.permute.xlu0 %352
        %354 = vrot.lane.b32.xlu0 %v345, 112
        %v355 = vpop.permute.xlu0 %354
        %vm356 = vcmask 31744
        %v357 = vsel %vm356, %v355, 0
        %v359 = vsel %vm356, %v345, 0
        %361 = vmatpush.xpose.msra.mxu0 0.0
        %362 = vmatpush.xpose.msra.mxu0 0.0
        %363 = vmatpush.xpose.msra.mxu0 0.0
        %364 = vmatpush.xpose.msra.mxu0 0.0
        %365 = vmatpush.xpose.msra.mxu0 0.0
        %366 = vmatpush.xpose.msra.mxu0 0.0
        %367 = vmatpush.xpose.msra.mxu0 0.0
        %368 = vmatpush.xpose.msra.mxu0 0.0
        %369 = vmatpush.xpose.msra.mxu0 0.0
        %370 = vmatpush.xpose.msra.mxu0 0.0
        %371 = vmatpush.xpose.msra.mxu0 0.0
        %372 = vmatpush.xpose.msra.mxu0 0.0
        %373 = vmatpush.xpose.msra.mxu0 0.0
        %374 = vmatpush.xpose.msra.mxu0 0.0
        %375 = vmatpush.xpose.msra.mxu0 0.0
        %376 = vmatpush.xpose.msra.mxu0 %v359
        %377 = vmatmul.f32.gmra.mxu0 %v357
        %v378 = vpop.f32.mrf.mxu0
        %v379 = vadd.f32 %v280, %v378
        %380 = vdwg.mxu0
        %381 = vrot.lane.b32.xlu0 %v349, 112
        %v382 = vpop.permute.xlu0 %381
        %v383 = vsel %vm356, %v382, 0
        %v385 = vsel %vm356, %v349, 0
        %387 = vmatpush.xpose.msra.mxu0 0.0
        %388 = vmatpush.xpose.msra.mxu0 0.0
        %389 = vmatpush.xpose.msra.mxu0 0.0
        %390 = vmatpush.xpose.msra.mxu0 0.0
        %391 = vmatpush.xpose.msra.mxu0 0.0
        %392 = vmatpush.xpose.msra.mxu0 0.0
        %393 = vmatpush.xpose.msra.mxu0 0.0
        %394 = vmatpush.xpose.msra.mxu0 0.0
        %395 = vmatpush.xpose.msra.mxu0 0.0
        %396 = vmatpush.xpose.msra.mxu0 0.0
        %397 = vmatpush.xpose.msra.mxu0 0.0
        %398 = vmatpush.xpose.msra.mxu0 0.0
        %399 = vmatpush.xpose.msra.mxu0 0.0
        %400 = vmatpush.xpose.msra.mxu0 0.0
        %401 = vmatpush.xpose.msra.mxu0 0.0
        %402 = vmatpush.xpose.msra.mxu0 %v385
        %403 = vmatmul.f32.gmra.mxu0 %v383
        %v404 = vpop.f32.mrf.mxu0
        %v405 = vadd.f32 %v280, %v404
        %406 = vdwg.mxu0
        %407 = vrot.lane.b32.xlu0 %v351, 112
        %v408 = vpop.permute.xlu0 %407
        %v409 = vsel %vm356, %v408, 0
        %v411 = vsel %vm356, %v351, 0
        %413 = vmatpush.xpose.msra.mxu0 0.0
        %414 = vmatpush.xpose.msra.mxu0 0.0
        %415 = vmatpush.xpose.msra.mxu0 0.0
        %416 = vmatpush.xpose.msra.mxu0 0.0
        %417 = vmatpush.xpose.msra.mxu0 0.0
        %418 = vmatpush.xpose.msra.mxu0 0.0
        %419 = vmatpush.xpose.msra.mxu0 0.0
        %420 = vmatpush.xpose.msra.mxu0 0.0
        %421 = vmatpush.xpose.msra.mxu0 0.0
        %422 = vmatpush.xpose.msra.mxu0 0.0
        %423 = vmatpush.xpose.msra.mxu0 0.0
        %424 = vmatpush.xpose.msra.mxu0 0.0
        %425 = vmatpush.xpose.msra.mxu0 0.0
        %426 = vmatpush.xpose.msra.mxu0 0.0
        %427 = vmatpush.xpose.msra.mxu0 0.0
        %428 = vmatpush.xpose.msra.mxu0 %v411
        %429 = vmatmul.f32.gmra.mxu0 %v409
        %v430 = vpop.f32.mrf.mxu0
        %v431 = vadd.f32 %v280, %v430
        %432 = vdwg.mxu0
        %433 = vrot.lane.b32.xlu0 %v353, 112
        %v434 = vpop.permute.xlu0 %433
        %v435 = vsel %vm356, %v434, 0
        %v437 = vsel %vm356, %v353, 0
        %439 = vmatpush.xpose.msra.mxu0 0.0
        %440 = vmatpush.xpose.msra.mxu0 0.0
        %441 = vmatpush.xpose.msra.mxu0 0.0
        %442 = vmatpush.xpose.msra.mxu0 0.0
        %443 = vmatpush.xpose.msra.mxu0 0.0
        %444 = vmatpush.xpose.msra.mxu0 0.0
        %445 = vmatpush.xpose.msra.mxu0 0.0
        %446 = vmatpush.xpose.msra.mxu0 0.0
        %447 = vmatpush.xpose.msra.mxu0 0.0
        %448 = vmatpush.xpose.msra.mxu0 0.0
        %449 = vmatpush.xpose.msra.mxu0 0.0
        %450 = vmatpush.xpose.msra.mxu0 0.0
        %451 = vmatpush.xpose.msra.mxu0 0.0
        %452 = vmatpush.xpose.msra.mxu0 0.0
        %453 = vmatpush.xpose.msra.mxu0 0.0
        %454 = vmatpush.xpose.msra.mxu0 %v437
        %455 = vmatmul.f32.gmra.mxu0 %v435
        %v456 = vpop.f32.mrf.mxu0
        %v457 = vadd.f32 %v280, %v456
        %458 = vdwg.mxu0
        %vm459 = vcmask 64512
        %v460 = vsel %vm459, %v379, -inf
        %461 = vmax.xlane.f32.xlu0 %v460
        %v462 = vpop.xlane.xlu0 %461
        %v463 = vsel %vm459, %v405, -inf
        %464 = vmax.xlane.f32.xlu0 %v463
        %v465 = vpop.xlane.xlu0 %464
        %v466 = vsel %vm459, %v431, -inf
        %467 = vmax.xlane.f32.xlu0 %v466
        %v468 = vpop.xlane.xlu0 %467
        %v469 = vsel %vm459, %v457, -inf
        %470 = vmax.xlane.f32.xlu0 %v469
        %v471 = vpop.xlane.xlu0 %470
        %v472 = vsub.f32 %v379, %v462
        %v473 = vsub.f32 %v405, %v465
        %v474 = vsub.f32 %v431, %v468
        %v475 = vsub.f32 %v457, %v471
        %v476 = vmul.f32 %v472, 1.442695
        %v477 = vpow.pop %v476
        %v478 = vmul.f32 %v473, 1.442695
        %v479 = vpow.pop %v478
        %v480 = vmul.f32 %v474, 1.442695
        %v481 = vpow.pop %v480
        %v482 = vmul.f32 %v475, 1.442695
        %v483 = vpow.pop %v482
        %v484 = vsel %vm459, %v477, 0.0
        %485 = vadd.xlane.f32.xlu0 %v484
        %v486 = vpop.xlane.xlu0 %485
        %v487 = vsel %vm459, %v479, 0.0
        %488 = vadd.xlane.f32.xlu0 %v487
        %v489 = vpop.xlane.xlu0 %488
        %v490 = vsel %vm459, %v481, 0.0
        %491 = vadd.xlane.f32.xlu0 %v490
        %v492 = vpop.xlane.xlu0 %491
        %v493 = vsel %vm459, %v483, 0.0
        %494 = vadd.xlane.f32.xlu0 %v493
        %v495 = vpop.xlane.xlu0 %494
        %v496 = vrcp.pop %v486
        %v497 = vrcp.pop %v489
        %v498 = vrcp.pop %v492
        %v499 = vrcp.pop %v495
        %v500 = vmul.f32 %v477, %v496
        %v501 = vmul.f32 %v479, %v497
        %v502 = vmul.f32 %v481, %v498
        %v503 = vmul.f32 %v483, %v499
        %504 = vrot.lane.b32.xlu0 %v345, 96
        %v505 = vpop.permute.xlu0 %504
        %v508 = vsel %vm459, %v500, 0
        %510 = vmatpush.msra.mxu0 0.0
        %511 = vmatpush.msra.mxu0 0.0
        %512 = vmatpush.msra.mxu0 0.0
        %513 = vmatpush.msra.mxu0 0.0
        %514 = vmatpush.msra.mxu0 0.0
        %515 = vmatpush.msra.mxu0 0.0
        %516 = vmatpush.msra.mxu0 0.0
        %517 = vmatpush.msra.mxu0 0.0
        %518 = vmatpush.msra.mxu0 0.0
        %519 = vmatpush.msra.mxu0 0.0
        %520 = vmatpush.msra.mxu0 0.0
        %521 = vmatpush.msra.mxu0 0.0
        %522 = vmatpush.msra.mxu0 0.0
        %523 = vmatpush.msra.mxu0 0.0
        %524 = vmatpush.msra.mxu0 0.0
        %525 = vmatpush.msra.mxu0 %v505
        %526 = vmatmul.f32.gmra.mxu0 %v508
        %v527 = vpop.f32.mrf.mxu0
        %v528 = vadd.f32 0.0, %v527
        %529 = vdwg.mxu0
        %530 = vrot.lane.b32.xlu0 %v349, 96
        %v531 = vpop.permute.xlu0 %530
        %v534 = vsel %vm459, %v501, 0
        %536 = vmatpush.msra.mxu0 0.0
        %537 = vmatpush.msra.mxu0 0.0
        %538 = vmatpush.msra.mxu0 0.0
        %539 = vmatpush.msra.mxu0 0.0
        %540 = vmatpush.msra.mxu0 0.0
        %541 = vmatpush.msra.mxu0 0.0
        %542 = vmatpush.msra.mxu0 0.0
        %543 = vmatpush.msra.mxu0 0.0
        %544 = vmatpush.msra.mxu0 0.0
        %545 = vmatpush.msra.mxu0 0.0
        %546 = vmatpush.msra.mxu0 0.0
        %547 = vmatpush.msra.mxu0 0.0
        %548 = vmatpush.msra.mxu0 0.0
        %549 = vmatpush.msra.mxu0 0.0
        %550 = vmatpush.msra.mxu0 0.0
        %551 = vmatpush.msra.mxu0 %v531
        %552 = vmatmul.f32.gmra.mxu0 %v534
        %v553 = vpop.f32.mrf.mxu0
        %v554 = vadd.f32 0.0, %v553
        %555 = vdwg.mxu0
        %556 = vrot.lane.b32.xlu0 %v351, 96
        %v557 = vpop.permute.xlu0 %556
        %v560 = vsel %vm459, %v502, 0
        %562 = vmatpush.msra.mxu0 0.0
        %563 = vmatpush.msra.mxu0 0.0
        %564 = vmatpush.msra.mxu0 0.0
        %565 = vmatpush.msra.mxu0 0.0
        %566 = vmatpush.msra.mxu0 0.0
        %567 = vmatpush.msra.mxu0 0.0
        %568 = vmatpush.msra.mxu0 0.0
        %569 = vmatpush.msra.mxu0 0.0
        %570 = vmatpush.msra.mxu0 0.0
        %571 = vmatpush.msra.mxu0 0.0
        %572 = vmatpush.msra.mxu0 0.0
        %573 = vmatpush.msra.mxu0 0.0
        %574 = vmatpush.msra.mxu0 0.0
        %575 = vmatpush.msra.mxu0 0.0
        %576 = vmatpush.msra.mxu0 0.0
        %577 = vmatpush.msra.mxu0 %v557
        %578 = vmatmul.f32.gmra.mxu0 %v560
        %v579 = vpop.f32.mrf.mxu0
        %v580 = vadd.f32 0.0, %v579
        %581 = vdwg.mxu0
        %582 = vrot.lane.b32.xlu0 %v353, 96
        %v583 = vpop.permute.xlu0 %582
        %v586 = vsel %vm459, %v503, 0
        %588 = vmatpush.msra.mxu0 0.0
        %589 = vmatpush.msra.mxu0 0.0
        %590 = vmatpush.msra.mxu0 0.0
        %591 = vmatpush.msra.mxu0 0.0
        %592 = vmatpush.msra.mxu0 0.0
        %593 = vmatpush.msra.mxu0 0.0
        %594 = vmatpush.msra.mxu0 0.0
        %595 = vmatpush.msra.mxu0 0.0
        %596 = vmatpush.msra.mxu0 0.0
        %597 = vmatpush.msra.mxu0 0.0
        %598 = vmatpush.msra.mxu0 0.0
        %599 = vmatpush.msra.mxu0 0.0
        %600 = vmatpush.msra.mxu0 0.0
        %601 = vmatpush.msra.mxu0 0.0
        %602 = vmatpush.msra.mxu0 0.0
        %603 = vmatpush.msra.mxu0 %v583
        %604 = vmatmul.f32.gmra.mxu0 %v586
        %v605 = vpop.f32.mrf.mxu0
        %v606 = vadd.f32 0.0, %v605
        %607 = vdwg.mxu0
        %609 = vrot.lane.b32.xlu0 %v554, 4
        %v610 = vpop.permute.xlu0 %609
        %613 = vrot.lane.b32.xlu0 %v580, 8
        %v614 = vpop.permute.xlu0 %613
        %617 = vrot.lane.b32.xlu0 %v606, 12
        %v618 = vpop.permute.xlu0 %617
        %v620 = vsel %vm356, %v528, %v610
        %v621 = vsel %vm459, %v620, %v614
        %vm622 = vcmask 97280
        %v623 = vsel %vm622, %v621, %v618
        %v624 = vld [vmem:[%s2] sm:$0xff]
        %v625 = vld [vmem:[%s2 + $0x8] sm:$0xff]
        %v627 = vsel %vm288, %v623, 0
        %629 = vmatpush.msra.mxu0 0.0
        %630 = vmatpush.msra.mxu0 0.0
        %631 = vmatpush.msra.mxu0 0.0
        %632 = vmatpush.msra.mxu0 0.0
        %633 = vmatpush.msra.mxu0 0.0
        %634 = vmatpush.msra.mxu0 0.0
        %635 = vmatpush.msra.mxu0 0.0
        %636 = vmatpush.msra.mxu0 0.0
        %637 = vmatpush.msra.mxu0 0.0
        %638 = vmatpush.msra.mxu0 0.0
        %639 = vmatpush.msra.mxu0 0.0
        %640 = vmatpush.msra.mxu0 0.0
        %641 = vmatpush.msra.mxu0 0.0
        %642 = vmatpush.msra.mxu0 0.0
        %643 = vmatpush.msra.mxu0 %v625
        %644 = vmatpush.msra.mxu0 %v624
        %645 = vmatmul.f32.gmra.mxu0 %v627
        %v646 = vpop.f32.mrf.mxu0
        %v647 = vadd.f32 0.0, %v646
        %648 = vdwg.mxu0
        %v649 = vadd.f32 %v274, %v647
        %v650 = vperm.slane %v285, 0
        %v651 = vadd.f32 %v649, %v650
        %v652 = vsel %vm288, %v651, 0.0
        %653 = vadd.xlane.f32.xlu0 %v652
        %v654 = vpop.xlane.xlu0 %653
        %v655 = vmul.f32 %v654, %v298
        %v656 = vsub.f32 %v651, %v655
        %v657 = vmul.f32 %v656, %v656
        %v658 = vsel %vm288, %v657, 0.0
        %659 = vadd.xlane.f32.xlu0 %v658
        %v660 = vpop.xlane.xlu0 %659
        %v661 = vmul.f32 %v660, %v298
        %v662 = vadd.f32 %v661, 1e-05
        %v663 = vrsqrt.pop %v662
        %v664 = vmul.f32 %v663, %v662
        %v665 = vmul.f32 %v664, %v663
        %v666 = vmul.f32 0.5, %v665
        %v667 = vsub.f32 1.5, %v666
        %v668 = vmul.f32 %v663, %v667
        %vm669 = vweird.f32 %v662
        %vm670 = vweird.f32 %v663
        %vm671 = vmor %vm669, %vm670
        %v672 = vsel %vm671, %v663, %v668
        %v673 = vmul.f32 %v656, %v672
        %v674 = vperm.slane %v283, 0
        %v675 = vmul.f32 %v673, %v674
        %v676 = vperm.slane %v284, 0
        %v677 = vadd.f32 %v675, %v676
        %v678 = vld [vmem:[%s3] sm:$0xff]
        %v679 = vld [vmem:[%s3 + $0x8] sm:$0xff]
        %v680 = vperm.slane %v287, 0
        %v682 = vsel %vm288, %v677, 0
        %684 = vmatpush.msra.mxu0 0.0
        %685 = vmatpush.msra.mxu0 0.0
        %686 = vmatpush.msra.mxu0 0.0
        %687 = vmatpush.msra.mxu0 0.0
        %688 = vmatpush.msra.mxu0 0.0
        %689 = vmatpush.msra.mxu0 0.0
        %690 = vmatpush.msra.mxu0 0.0
        %691 = vmatpush.msra.mxu0 0.0
        %692 = vmatpush.msra.mxu0 0.0
        %693 = vmatpush.msra.mxu0 0.0
        %694 = vmatpush.msra.mxu0 0.0
        %695 = vmatpush.msra.mxu0 0.0
        %696 = vmatpush.msra.mxu0 0.0
        %697 = vmatpush.msra.mxu0 0.0
        %698 = vmatpush.msra.mxu0 %v679
        %699 = vmatpush.msra.mxu0 %v678
        %700 = vmatmul.f32.gmra.mxu0 %v682
        %v701 = vpop.f32.mrf.mxu0
        %v702 = vadd.f32 %v680, %v701
        %703 = vdwg.mxu0
        %v704 = vmax.f32 %v702, 0.0
        %v705 = vld [vmem:[%s4] sm:$0xff]
        %v706 = vld [vmem:[%s4 + $0x8] sm:$0xff]
        %v707 = vld [vmem:[%s4 + $0x10] sm:$0xff]
        %v708 = vld [vmem:[%s4 + $0x18] sm:$0xff]
        %v709 = vld [vmem:[%s4 + $0x20] sm:$0xff]
        %v710 = vld [vmem:[%s4 + $0x28] sm:$0xff]
        %v711 = vld [vmem:[%s4 + $0x30] sm:$0xff]
        %v712 = vld [vmem:[%s4 + $0x38] sm:$0xff]
        %v713 = vperm.slane %v286, 0
        %vm714 = vcmask 523264
        %v716 = vsel %vm714, %v704, 0
        %718 = vmatpush.msra.mxu0 0.0
        %719 = vmatpush.msra.mxu0 0.0
        %720 = vmatpush.msra.mxu0 0.0
        %721 = vmatpush.msra.mxu0 0.0
        %722 = vmatpush.msra.mxu0 0.0
        %723 = vmatpush.msra.mxu0 0.0
        %724 = vmatpush.msra.mxu0 0.0
        %725 = vmatpush.msra.mxu0 0.0
        %726 = vmatpush.msra.mxu0 %v712
        %727 = vmatpush.msra.mxu0 %v711
        %728 = vmatpush.msra.mxu0 %v710
        %729 = vmatpush.msra.mxu0 %v709
        %730 = vmatpush.msra.mxu0 %v708
        %731 = vmatpush.msra.mxu0 %v707
        %732 = vmatpush.msra.mxu0 %v706
        %733 = vmatpush.msra.mxu0 %v705
        %734 = vmatmul.f32.gmra.mxu0 %v716
        %v735 = vpop.f32.mrf.mxu0
        %v736 = vadd.f32 %v713, %v735
        %737 = vdwg.mxu0
        %v738 = vadd.f32 %v651, %v736
        %v739 = vld [vmem:[%s6 + $0x7] sm:$0x1]
        %v740 = vld [vmem:[%s6 + $0x8] sm:$0x1]
        %v741 = vld [vmem:[%s6 + $0x9] sm:$0x1]
        %v742 = vld [vmem:[%s6 + $0xa] sm:$0x1]
        %v743 = vld [vmem:[%s6 + $0xb] sm:$0x1]
        %v744 = vld [vmem:[%s6 + $0xc] sm:$0x1]
        %v745 = vld [vmem:[%s6 + $0xd] sm:$0x1]
        %v746 = vsel %vm288, %v738, 0.0
        %747 = vadd.xlane.f32.xlu0 %v746
        %v748 = vpop.xlane.xlu0 %747
        %v749 = vmul.f32 %v748, %v298
        %v750 = vsub.f32 %v738, %v749
        %v751 = vmul.f32 %v750, %v750
        %v752 = vsel %vm288, %v751, 0.0
        %753 = vadd.xlane.f32.xlu0 %v752
        %v754 = vpop.xlane.xlu0 %753
        %v755 = vmul.f32 %v754, %v298
        %v756 = vadd.f32 %v755, 1e-05
        %v757 = vrsqrt.pop %v756
        %v758 = vmul.f32 %v757, %v756
        %v759 = vmul.f32 %v758, %v757
        %v760 = vmul.f32 0.5, %v759
        %v761 = vsub.f32 1.5, %v760
        %v762 = vmul.f32 %v757, %v761
        %vm763 = vweird.f32 %v756
        %vm764 = vweird.f32 %v757
        %vm765 = vmor %vm763, %vm764
        %v766 = vsel %vm765, %v757, %v762
        %v767 = vmul.f32 %v750, %v766
        %v768 = vperm.slane %v739, 0
        %v769 = vmul.f32 %v767, %v768
        %v770 = vperm.slane %v740, 0
        %v771 = vadd.f32 %v769, %v770
        %s772 = scalar_lea.vmem %s1, 16
        %v773 = vld [vmem:[%s772] sm:$0xff]
        %v774 = vld [vmem:[%s772 + $0x8] sm:$0xff]
        %v776 = vsel %vm288, %v771, 0
        %778 = vmatpush.msra.mxu0 0.0
        %779 = vmatpush.msra.mxu0 0.0
        %780 = vmatpush.msra.mxu0 0.0
        %781 = vmatpush.msra.mxu0 0.0
        %782 = vmatpush.msra.mxu0 0.0
        %783 = vmatpush.msra.mxu0 0.0
        %784 = vmatpush.msra.mxu0 0.0
        %785 = vmatpush.msra.mxu0 0.0
        %786 = vmatpush.msra.mxu0 0.0
        %787 = vmatpush.msra.mxu0 0.0
        %788 = vmatpush.msra.mxu0 0.0
        %789 = vmatpush.msra.mxu0 0.0
        %790 = vmatpush.msra.mxu0 0.0
        %791 = vmatpush.msra.mxu0 0.0
        %792 = vmatpush.msra.mxu0 %v774
        %793 = vmatpush.msra.mxu0 %v773
        %794 = vmatmul.f32.gmra.mxu0 %v776
        %v795 = vpop.f32.mrf.mxu0
        %v796 = vadd.f32 0.0, %v795
        %797 = vdwg.mxu0
        %799 = vrot.lane.b32.xlu0 %v796, 124
        %v800 = vpop.permute.xlu0 %799
        %801 = vrot.lane.b32.xlu0 %v796, 120
        %v802 = vpop.permute.xlu0 %801
        %803 = vrot.lane.b32.xlu0 %v796, 116
        %v804 = vpop.permute.xlu0 %803
        %805 = vrot.lane.b32.xlu0 %v796, 112
        %v806 = vpop.permute.xlu0 %805
        %v807 = vsel %vm356, %v806, 0
        %v809 = vsel %vm356, %v796, 0
        %811 = vmatpush.xpose.msra.mxu0 0.0
        %812 = vmatpush.xpose.msra.mxu0 0.0
        %813 = vmatpush.xpose.msra.mxu0 0.0
        %814 = vmatpush.xpose.msra.mxu0 0.0
        %815 = vmatpush.xpose.msra.mxu0 0.0
        %816 = vmatpush.xpose.msra.mxu0 0.0
        %817 = vmatpush.xpose.msra.mxu0 0.0
        %818 = vmatpush.xpose.msra.mxu0 0.0
        %819 = vmatpush.xpose.msra.mxu0 0.0
        %820 = vmatpush.xpose.msra.mxu0 0.0
        %821 = vmatpush.xpose.msra.mxu0 0.0
        %822 = vmatpush.xpose.msra.mxu0 0.0
        %823 = vmatpush.xpose.msra.mxu0 0.0
        %824 = vmatpush.xpose.msra.mxu0 0.0
        %825 = vmatpush.xpose.msra.mxu0 0.0
        %826 = vmatpush.xpose.msra.mxu0 %v809
        %827 = vmatmul.f32.gmra.mxu0 %v807
        %v828 = vpop.f32.mrf.mxu0
        %v829 = vadd.f32 %v280, %v828
        %830 = vdwg.mxu0
        %831 = vrot.lane.b32.xlu0 %v800, 112
        %v832 = vpop.permute.xlu0 %831
        %v833 = vsel %vm356, %v832, 0
        %v835 = vsel %vm356, %v800, 0
        %837 = vmatpush.xpose.msra.mxu0 0.0
        %838 = vmatpush.xpose.msra.mxu0 0.0
        %839 = vmatpush.xpose.msra.mxu0 0.0
        %840 = vmatpush.xpose.msra.mxu0 0.0
        %841 = vmatpush.xpose.msra.mxu0 0.0
        %842 = vmatpush.xpose.msra.mxu0 0.0
        %843 = vmatpush.xpose.msra.mxu0 0.0
        %844 = vmatpush.xpose.msra.mxu0 0.0
        %845 = vmatpush.xpose.msra.mxu0 0.0
        %846 = vmatpush.xpose.msra.mxu0 0.0
        %847 = vmatpush.xpose.msra.mxu0 0.0
        %848 = vmatpush.xpose.msra.mxu0 0.0
        %849 = vmatpush.xpose.msra.mxu0 0.0
        %850 = vmatpush.xpose.msra.mxu0 0.0
        %851 = vmatpush.xpose.msra.mxu0 0.0
        %852 = vmatpush.xpose.msra.mxu0 %v835
        %853 = vmatmul.f32.gmra.mxu0 %v833
        %v854 = vpop.f32.mrf.mxu0
        %v855 = vadd.f32 %v280, %v854
        %856 = vdwg.mxu0
        %857 = vrot.lane.b32.xlu0 %v802, 112
        %v858 = vpop.permute.xlu0 %857
        %v859 = vsel %vm356, %v858, 0
        %v861 = vsel %vm356, %v802, 0
        %863 = vmatpush.xpose.msra.mxu0 0.0
        %864 = vmatpush.xpose.msra.mxu0 0.0
        %865 = vmatpush.xpose.msra.mxu0 0.0
        %866 = vmatpush.xpose.msra.mxu0 0.0
        %867 = vmatpush.xpose.msra.mxu0 0.0
        %868 = vmatpush.xpose.msra.mxu0 0.0
        %869 = vmatpush.xpose.msra.mxu0 0.0
        %870 = vmatpush.xpose.msra.mxu0 0.0
        %871 = vmatpush.xpose.msra.mxu0 0.0
        %872 = vmatpush.xpose.msra.mxu0 0.0
        %873 = vmatpush.xpose.msra.mxu0 0.0
        %874 = vmatpush.xpose.msra.mxu0 0.0
        %875 = vmatpush.xpose.msra.mxu0 0.0
        %876 = vmatpush.xpose.msra.mxu0 0.0
        %877 = vmatpush.xpose.msra.mxu0 0.0
        %878 = vmatpush.xpose.msra.mxu0 %v861
        %879 = vmatmul.f32.gmra.mxu0 %v859
        %v880 = vpop.f32.mrf.mxu0
        %v881 = vadd.f32 %v280, %v880
        %882 = vdwg.mxu0
        %883 = vrot.lane.b32.xlu0 %v804, 112
        %v884 = vpop.permute.xlu0 %883
        %v885 = vsel %vm356, %v884, 0
        %v887 = vsel %vm356, %v804, 0
        %889 = vmatpush.xpose.msra.mxu0 0.0
        %890 = vmatpush.xpose.msra.mxu0 0.0
        %891 = vmatpush.xpose.msra.mxu0 0.0
        %892 = vmatpush.xpose.msra.mxu0 0.0
        %893 = vmatpush.xpose.msra.mxu0 0.0
        %894 = vmatpush.xpose.msra.mxu0 0.0
        %895 = vmatpush.xpose.msra.mxu0 0.0
        %896 = vmatpush.xpose.msra.mxu0 0.0
        %897 = vmatpush.xpose.msra.mxu0 0.0
        %898 = vmatpush.xpose.msra.mxu0 0.0
        %899 = vmatpush.xpose.msra.mxu0 0.0
        %900 = vmatpush.xpose.msra.mxu0 0.0
        %901 = vmatpush.xpose.msra.mxu0 0.0
        %902 = vmatpush.xpose.msra.mxu0 0.0
        %903 = vmatpush.xpose.msra.mxu0 0.0
        %904 = vmatpush.xpose.msra.mxu0 %v887
        %905 = vmatmul.f32.gmra.mxu0 %v885
        %v906 = vpop.f32.mrf.mxu0
        %v907 = vadd.f32 %v280, %v906
        %908 = vdwg.mxu0
        %v909 = vsel %vm459, %v829, -inf
        %910 = vmax.xlane.f32.xlu0 %v909
        %v911 = vpop.xlane.xlu0 %910
        %v912 = vsel %vm459, %v855, -inf
        %913 = vmax.xlane.f32.xlu0 %v912
        %v914 = vpop.xlane.xlu0 %913
        %v915 = vsel %vm459, %v881, -inf
        %916 = vmax.xlane.f32.xlu0 %v915
        %v917 = vpop.xlane.xlu0 %916
        %v918 = vsel %vm459, %v907, -inf
        %919 = vmax.xlane.f32.xlu0 %v918
        %v920 = vpop.xlane.xlu0 %919
        %v921 = vsub.f32 %v829, %v911
        %v922 = vsub.f32 %v855, %v914
        %v923 = vsub.f32 %v881, %v917
        %v924 = vsub.f32 %v907, %v920
        %v925 = vmul.f32 %v921, 1.442695
        %v926 = vpow.pop %v925
        %v927 = vmul.f32 %v922, 1.442695
        %v928 = vpow.pop %v927
        %v929 = vmul.f32 %v923, 1.442695
        %v930 = vpow.pop %v929
        %v931 = vmul.f32 %v924, 1.442695
        %v932 = vpow.pop %v931
        %v933 = vsel %vm459, %v926, 0.0
        %934 = vadd.xlane.f32.xlu0 %v933
        %v935 = vpop.xlane.xlu0 %934
        %v936 = vsel %vm459, %v928, 0.0
        %937 = vadd.xlane.f32.xlu0 %v936
        %v938 = vpop.xlane.xlu0 %937
        %v939 = vsel %vm459, %v930, 0.0
        %940 = vadd.xlane.f32.xlu0 %v939
        %v941 = vpop.xlane.xlu0 %940
        %v942 = vsel %vm459, %v932, 0.0
        %943 = vadd.xlane.f32.xlu0 %v942
        %v944 = vpop.xlane.xlu0 %943
        %v945 = vrcp.pop %v935
        %v946 = vrcp.pop %v938
        %v947 = vrcp.pop %v941
        %v948 = vrcp.pop %v944
        %v949 = vmul.f32 %v926, %v945
        %v950 = vmul.f32 %v928, %v946
        %v951 = vmul.f32 %v930, %v947
        %v952 = vmul.f32 %v932, %v948
        %953 = vrot.lane.b32.xlu0 %v796, 96
        %v954 = vpop.permute.xlu0 %953
        %v957 = vsel %vm459, %v949, 0
        %959 = vmatpush.msra.mxu0 0.0
        %960 = vmatpush.msra.mxu0 0.0
        %961 = vmatpush.msra.mxu0 0.0
        %962 = vmatpush.msra.mxu0 0.0
        %963 = vmatpush.msra.mxu0 0.0
        %964 = vmatpush.msra.mxu0 0.0
        %965 = vmatpush.msra.mxu0 0.0
        %966 = vmatpush.msra.mxu0 0.0
        %967 = vmatpush.msra.mxu0 0.0
        %968 = vmatpush.msra.mxu0 0.0
        %969 = vmatpush.msra.mxu0 0.0
        %970 = vmatpush.msra.mxu0 0.0
        %971 = vmatpush.msra.mxu0 0.0
        %972 = vmatpush.msra.mxu0 0.0
        %973 = vmatpush.msra.mxu0 0.0
        %974 = vmatpush.msra.mxu0 %v954
        %975 = vmatmul.f32.gmra.mxu0 %v957
        %v976 = vpop.f32.mrf.mxu0
        %v977 = vadd.f32 0.0, %v976
        %978 = vdwg.mxu0
        %979 = vrot.lane.b32.xlu0 %v800, 96
        %v980 = vpop.permute.xlu0 %979
        %v983 = vsel %vm459, %v950, 0
        %985 = vmatpush.msra.mxu0 0.0
        %986 = vmatpush.msra.mxu0 0.0
        %987 = vmatpush.msra.mxu0 0.0
        %988 = vmatpush.msra.mxu0 0.0
        %989 = vmatpush.msra.mxu0 0.0
        %990 = vmatpush.msra.mxu0 0.0
        %991 = vmatpush.msra.mxu0 0.0
        %992 = vmatpush.msra.mxu0 0.0
        %993 = vmatpush.msra.mxu0 0.0
        %994 = vmatpush.msra.mxu0 0.0
        %995 = vmatpush.msra.mxu0 0.0
        %996 = vmatpush.msra.mxu0 0.0
        %997 = vmatpush.msra.mxu0 0.0
        %998 = vmatpush.msra.mxu0 0.0
        %999 = vmatpush.msra.mxu0 0.0
        %1000 = vmatpush.msra.mxu0 %v980
        %1001 = vmatmul.f32.gmra.mxu0 %v983
        %v1002 = vpop.f32.mrf.mxu0
        %v1003 = vadd.f32 0.0, %v1002
        %1004 = vdwg.mxu0
        %1005 = vrot.lane.b32.xlu0 %v802, 96
        %v1006 = vpop.permute.xlu0 %1005
        %v1009 = vsel %vm459, %v951, 0
        %1011 = vmatpush.msra.mxu0 0.0
        %1012 = vmatpush.msra.mxu0 0.0
        %1013 = vmatpush.msra.mxu0 0.0
        %1014 = vmatpush.msra.mxu0 0.0
        %1015 = vmatpush.msra.mxu0 0.0
        %1016 = vmatpush.msra.mxu0 0.0
        %1017 = vmatpush.msra.mxu0 0.0
        %1018 = vmatpush.msra.mxu0 0.0
        %1019 = vmatpush.msra.mxu0 0.0
        %1020 = vmatpush.msra.mxu0 0.0
        %1021 = vmatpush.msra.mxu0 0.0
        %1022 = vmatpush.msra.mxu0 0.0
        %1023 = vmatpush.msra.mxu0 0.0
        %1024 = vmatpush.msra.mxu0 0.0
        %1025 = vmatpush.msra.mxu0 0.0
        %1026 = vmatpush.msra.mxu0 %v1006
        %1027 = vmatmul.f32.gmra.mxu0 %v1009
        %v1028 = vpop.f32.mrf.mxu0
        %v1029 = vadd.f32 0.0, %v1028
        %1030 = vdwg.mxu0
        %1031 = vrot.lane.b32.xlu0 %v804, 96
        %v1032 = vpop.permute.xlu0 %1031
        %v1035 = vsel %vm459, %v952, 0
        %1037 = vmatpush.msra.mxu0 0.0
        %1038 = vmatpush.msra.mxu0 0.0
        %1039 = vmatpush.msra.mxu0 0.0
        %1040 = vmatpush.msra.mxu0 0.0
        %1041 = vmatpush.msra.mxu0 0.0
        %1042 = vmatpush.msra.mxu0 0.0
        %1043 = vmatpush.msra.mxu0 0.0
        %1044 = vmatpush.msra.mxu0 0.0
        %1045 = vmatpush.msra.mxu0 0.0
        %1046 = vmatpush.msra.mxu0 0.0
        %1047 = vmatpush.msra.mxu0 0.0
        %1048 = vmatpush.msra.mxu0 0.0
        %1049 = vmatpush.msra.mxu0 0.0
        %1050 = vmatpush.msra.mxu0 0.0
        %1051 = vmatpush.msra.mxu0 0.0
        %1052 = vmatpush.msra.mxu0 %v1032
        %1053 = vmatmul.f32.gmra.mxu0 %v1035
        %v1054 = vpop.f32.mrf.mxu0
        %v1055 = vadd.f32 0.0, %v1054
        %1056 = vdwg.mxu0
        %1058 = vrot.lane.b32.xlu0 %v1003, 4
        %v1059 = vpop.permute.xlu0 %1058
        %1062 = vrot.lane.b32.xlu0 %v1029, 8
        %v1063 = vpop.permute.xlu0 %1062
        %1066 = vrot.lane.b32.xlu0 %v1055, 12
        %v1067 = vpop.permute.xlu0 %1066
        %v1069 = vsel %vm356, %v977, %v1059
        %v1070 = vsel %vm459, %v1069, %v1063
        %v1071 = vsel %vm622, %v1070, %v1067
        %s1072 = scalar_lea.vmem %s2, 16
        %v1073 = vld [vmem:[%s1072] sm:$0xff]
        %v1074 = vld [vmem:[%s1072 + $0x8] sm:$0xff]
        %v1076 = vsel %vm288, %v1071, 0
        %1078 = vmatpush.msra.mxu0 0.0
        %1079 = vmatpush.msra.mxu0 0.0
        %1080 = vmatpush.msra.mxu0 0.0
        %1081 = vmatpush.msra.mxu0 0.0
        %1082 = vmatpush.msra.mxu0 0.0
        %1083 = vmatpush.msra.mxu0 0.0
        %1084 = vmatpush.msra.mxu0 0.0
        %1085 = vmatpush.msra.mxu0 0.0
        %1086 = vmatpush.msra.mxu0 0.0
        %1087 = vmatpush.msra.mxu0 0.0
        %1088 = vmatpush.msra.mxu0 0.0
        %1089 = vmatpush.msra.mxu0 0.0
        %1090 = vmatpush.msra.mxu0 0.0
        %1091 = vmatpush.msra.mxu0 0.0
        %1092 = vmatpush.msra.mxu0 %v1074
        %1093 = vmatpush.msra.mxu0 %v1073
        %1094 = vmatmul.f32.gmra.mxu0 %v1076
        %v1095 = vpop.f32.mrf.mxu0
        %v1096 = vadd.f32 0.0, %v1095
        %1097 = vdwg.mxu0
        %v1098 = vadd.f32 %v738, %v1096
        %v1099 = vperm.slane %v743, 0
        %v1100 = vadd.f32 %v1098, %v1099
        %v1101 = vsel %vm288, %v1100, 0.0
        %1102 = vadd.xlane.f32.xlu0 %v1101
        %v1103 = vpop.xlane.xlu0 %1102
        %v1104 = vmul.f32 %v1103, %v298
        %v1105 = vsub.f32 %v1100, %v1104
        %v1106 = vmul.f32 %v1105, %v1105
        %v1107 = vsel %vm288, %v1106, 0.0
        %1108 = vadd.xlane.f32.xlu0 %v1107
        %v1109 = vpop.xlane.xlu0 %1108
        %v1110 = vmul.f32 %v1109, %v298
        %v1111 = vadd.f32 %v1110, 1e-05
        %v1112 = vrsqrt.pop %v1111
        %v1113 = vmul.f32 %v1112, %v1111
        %v1114 = vmul.f32 %v1113, %v1112
        %v1115 = vmul.f32 0.5, %v1114
        %v1116 = vsub.f32 1.5, %v1115
        %v1117 = vmul.f32 %v1112, %v1116
        %vm1118 = vweird.f32 %v1111
        %vm1119 = vweird.f32 %v1112
        %vm1120 = vmor %vm1118, %vm1119
        %v1121 = vsel %vm1120, %v1112, %v1117
        %v1122 = vmul.f32 %v1105, %v1121
        %v1123 = vperm.slane %v741, 0
        %v1124 = vmul.f32 %v1122, %v1123
        %v1125 = vperm.slane %v742, 0
        %v1126 = vadd.f32 %v1124, %v1125
        %s1127 = scalar_lea.vmem %s3, 16
        %v1128 = vld [vmem:[%s1127] sm:$0xff]
        %v1129 = vld [vmem:[%s1127 + $0x8] sm:$0xff]
        %v1130 = vperm.slane %v745, 0
        %v1132 = vsel %vm288, %v1126, 0
        %1134 = vmatpush.msra.mxu0 0.0
        %1135 = vmatpush.msra.mxu0 0.0
        %1136 = vmatpush.msra.mxu0 0.0
        %1137 = vmatpush.msra.mxu0 0.0
        %1138 = vmatpush.msra.mxu0 0.0
        %1139 = vmatpush.msra.mxu0 0.0
        %1140 = vmatpush.msra.mxu0 0.0
        %1141 = vmatpush.msra.mxu0 0.0
        %1142 = vmatpush.msra.mxu0 0.0
        %1143 = vmatpush.msra.mxu0 0.0
        %1144 = vmatpush.msra.mxu0 0.0
        %1145 = vmatpush.msra.mxu0 0.0
        %1146 = vmatpush.msra.mxu0 0.0
        %1147 = vmatpush.msra.mxu0 0.0
        %1148 = vmatpush.msra.mxu0 %v1129
        %1149 = vmatpush.msra.mxu0 %v1128
        %1150 = vmatmul.f32.gmra.mxu0 %v1132
        %v1151 = vpop.f32.mrf.mxu0
        %v1152 = vadd.f32 %v1130, %v1151
        %1153 = vdwg.mxu0
        %v1154 = vmax.f32 %v1152, 0.0
        %s1155 = scalar_lea.vmem %s4, 64
        %v1156 = vld [vmem:[%s1155] sm:$0xff]
        %v1157 = vld [vmem:[%s1155 + $0x8] sm:$0xff]
        %v1158 = vld [vmem:[%s1155 + $0x10] sm:$0xff]
        %v1159 = vld [vmem:[%s1155 + $0x18] sm:$0xff]
        %v1160 = vld [vmem:[%s1155 + $0x20] sm:$0xff]
        %v1161 = vld [vmem:[%s1155 + $0x28] sm:$0xff]
        %v1162 = vld [vmem:[%s1155 + $0x30] sm:$0xff]
        %v1163 = vld [vmem:[%s1155 + $0x38] sm:$0xff]
        %v1164 = vperm.slane %v744, 0
        %v1166 = vsel %vm714, %v1154, 0
        %1168 = vmatpush.msra.mxu0 0.0
        %1169 = vmatpush.msra.mxu0 0.0
        %1170 = vmatpush.msra.mxu0 0.0
        %1171 = vmatpush.msra.mxu0 0.0
        %1172 = vmatpush.msra.mxu0 0.0
        %1173 = vmatpush.msra.mxu0 0.0
        %1174 = vmatpush.msra.mxu0 0.0
        %1175 = vmatpush.msra.mxu0 0.0
        %1176 = vmatpush.msra.mxu0 %v1163
        %1177 = vmatpush.msra.mxu0 %v1162
        %1178 = vmatpush.msra.mxu0 %v1161
        %1179 = vmatpush.msra.mxu0 %v1160
        %1180 = vmatpush.msra.mxu0 %v1159
        %1181 = vmatpush.msra.mxu0 %v1158
        %1182 = vmatpush.msra.mxu0 %v1157
        %1183 = vmatpush.msra.mxu0 %v1156
        %1184 = vmatmul.f32.gmra.mxu0 %v1166
        %v1185 = vpop.f32.mrf.mxu0
        %v1186 = vadd.f32 %v1164, %v1185
        %1187 = vdwg.mxu0
        %v1188 = vadd.f32 %v1100, %v1186
        %v1189 = vld [vmem:[%s6 + $0xe] sm:$0x1]
        %v1190 = vld [vmem:[%s6 + $0xf] sm:$0x1]
        %v1191 = vld [vmem:[%s6 + $0x10] sm:$0x1]
        %v1192 = vld [vmem:[%s6 + $0x11] sm:$0x1]
        %v1193 = vld [vmem:[%s6 + $0x12] sm:$0x1]
        %v1194 = vld [vmem:[%s6 + $0x13] sm:$0x1]
        %v1195 = vld [vmem:[%s6 + $0x14] sm:$0x1]
        %v1196 = vsel %vm288, %v1188, 0.0
        %1197 = vadd.xlane.f32.xlu0 %v1196
        %v1198 = vpop.xlane.xlu0 %1197
        %v1199 = vmul.f32 %v1198, %v298
        %v1200 = vsub.f32 %v1188, %v1199
        %v1201 = vmul.f32 %v1200, %v1200
        %v1202 = vsel %vm288, %v1201, 0.0
        %1203 = vadd.xlane.f32.xlu0 %v1202
        %v1204 = vpop.xlane.xlu0 %1203
        %v1205 = vmul.f32 %v1204, %v298
        %v1206 = vadd.f32 %v1205, 1e-05
        %v1207 = vrsqrt.pop %v1206
        %v1208 = vmul.f32 %v1207, %v1206
        %v1209 = vmul.f32 %v1208, %v1207
        %v1210 = vmul.f32 0.5, %v1209
        %v1211 = vsub.f32 1.5, %v1210
        %v1212 = vmul.f32 %v1207, %v1211
        %vm1213 = vweird.f32 %v1206
        %vm1214 = vweird.f32 %v1207
        %vm1215 = vmor %vm1213, %vm1214
        %v1216 = vsel %vm1215, %v1207, %v1212
        %v1217 = vmul.f32 %v1200, %v1216
        %v1218 = vperm.slane %v1189, 0
        %v1219 = vmul.f32 %v1217, %v1218
        %v1220 = vperm.slane %v1190, 0
        %v1221 = vadd.f32 %v1219, %v1220
        %s1222 = scalar_lea.vmem %s1, 32
        %v1223 = vld [vmem:[%s1222] sm:$0xff]
        %v1224 = vld [vmem:[%s1222 + $0x8] sm:$0xff]
        %v1226 = vsel %vm288, %v1221, 0
        %1228 = vmatpush.msra.mxu0 0.0
        %1229 = vmatpush.msra.mxu0 0.0
        %1230 = vmatpush.msra.mxu0 0.0
        %1231 = vmatpush.msra.mxu0 0.0
        %1232 = vmatpush.msra.mxu0 0.0
        %1233 = vmatpush.msra.mxu0 0.0
        %1234 = vmatpush.msra.mxu0 0.0
        %1235 = vmatpush.msra.mxu0 0.0
        %1236 = vmatpush.msra.mxu0 0.0
        %1237 = vmatpush.msra.mxu0 0.0
        %1238 = vmatpush.msra.mxu0 0.0
        %1239 = vmatpush.msra.mxu0 0.0
        %1240 = vmatpush.msra.mxu0 0.0
        %1241 = vmatpush.msra.mxu0 0.0
        %1242 = vmatpush.msra.mxu0 %v1224
        %1243 = vmatpush.msra.mxu0 %v1223
        %1244 = vmatmul.f32.gmra.mxu0 %v1226
        %v1245 = vpop.f32.mrf.mxu0
        %v1246 = vadd.f32 0.0, %v1245
        %1247 = vdwg.mxu0
        %1249 = vrot.lane.b32.xlu0 %v1246, 124
        %v1250 = vpop.permute.xlu0 %1249
        %1251 = vrot.lane.b32.xlu0 %v1246, 120
        %v1252 = vpop.permute.xlu0 %1251
        %1253 = vrot.lane.b32.xlu0 %v1246, 116
        %v1254 = vpop.permute.xlu0 %1253
        %1255 = vrot.lane.b32.xlu0 %v1246, 112
        %v1256 = vpop.permute.xlu0 %1255
        %v1257 = vsel %vm356, %v1256, 0
        %v1259 = vsel %vm356, %v1246, 0
        %1261 = vmatpush.xpose.msra.mxu0 0.0
        %1262 = vmatpush.xpose.msra.mxu0 0.0
        %1263 = vmatpush.xpose.msra.mxu0 0.0
        %1264 = vmatpush.xpose.msra.mxu0 0.0
        %1265 = vmatpush.xpose.msra.mxu0 0.0
        %1266 = vmatpush.xpose.msra.mxu0 0.0
        %1267 = vmatpush.xpose.msra.mxu0 0.0
        %1268 = vmatpush.xpose.msra.mxu0 0.0
        %1269 = vmatpush.xpose.msra.mxu0 0.0
        %1270 = vmatpush.xpose.msra.mxu0 0.0
        %1271 = vmatpush.xpose.msra.mxu0 0.0
        %1272 = vmatpush.xpose.msra.mxu0 0.0
        %1273 = vmatpush.xpose.msra.mxu0 0.0
        %1274 = vmatpush.xpose.msra.mxu0 0.0
        %1275 = vmatpush.xpose.msra.mxu0 0.0
        %1276 = vmatpush.xpose.msra.mxu0 %v1259
        %1277 = vmatmul.f32.gmra.mxu0 %v1257
        %v1278 = vpop.f32.mrf.mxu0
        %v1279 = vadd.f32 %v280, %v1278
        %1280 = vdwg.mxu0
        %1281 = vrot.lane.b32.xlu0 %v1250, 112
        %v1282 = vpop.permute.xlu0 %1281
        %v1283 = vsel %vm356, %v1282, 0
        %v1285 = vsel %vm356, %v1250, 0
        %1287 = vmatpush.xpose.msra.mxu0 0.0
        %1288 = vmatpush.xpose.msra.mxu0 0.0
        %1289 = vmatpush.xpose.msra.mxu0 0.0
        %1290 = vmatpush.xpose.msra.mxu0 0.0
        %1291 = vmatpush.xpose.msra.mxu0 0.0
        %1292 = vmatpush.xpose.msra.mxu0 0.0
        %1293 = vmatpush.xpose.msra.mxu0 0.0
        %1294 = vmatpush.xpose.msra.mxu0 0.0
        %1295 = vmatpush.xpose.msra.mxu0 0.0
        %1296 = vmatpush.xpose.msra.mxu0 0.0
        %1297 = vmatpush.xpose.msra.mxu0 0.0
        %1298 = vmatpush.xpose.msra.mxu0 0.0
        %1299 = vmatpush.xpose.msra.mxu0 0.0
        %1300 = vmatpush.xpose.msra.mxu0 0.0
        %1301 = vmatpush.xpose.msra.mxu0 0.0
        %1302 = vmatpush.xpose.msra.mxu0 %v1285
        %1303 = vmatmul.f32.gmra.mxu0 %v1283
        %v1304 = vpop.f32.mrf.mxu0
        %v1305 = vadd.f32 %v280, %v1304
        %1306 = vdwg.mxu0
        %1307 = vrot.lane.b32.xlu0 %v1252, 112
        %v1308 = vpop.permute.xlu0 %1307
        %v1309 = vsel %vm356, %v1308, 0
        %v1311 = vsel %vm356, %v1252, 0
        %1313 = vmatpush.xpose.msra.mxu0 0.0
        %1314 = vmatpush.xpose.msra.mxu0 0.0
        %1315 = vmatpush.xpose.msra.mxu0 0.0
        %1316 = vmatpush.xpose.msra.mxu0 0.0
        %1317 = vmatpush.xpose.msra.mxu0 0.0
        %1318 = vmatpush.xpose.msra.mxu0 0.0
        %1319 = vmatpush.xpose.msra.mxu0 0.0
        %1320 = vmatpush.xpose.msra.mxu0 0.0
        %1321 = vmatpush.xpose.msra.mxu0 0.0
        %1322 = vmatpush.xpose.msra.mxu0 0.0
        %1323 = vmatpush.xpose.msra.mxu0 0.0
        %1324 = vmatpush.xpose.msra.mxu0 0.0
        %1325 = vmatpush.xpose.msra.mxu0 0.0
        %1326 = vmatpush.xpose.msra.mxu0 0.0
        %1327 = vmatpush.xpose.msra.mxu0 0.0
        %1328 = vmatpush.xpose.msra.mxu0 %v1311
        %1329 = vmatmul.f32.gmra.mxu0 %v1309
        %v1330 = vpop.f32.mrf.mxu0
        %v1331 = vadd.f32 %v280, %v1330
        %1332 = vdwg.mxu0
        %1333 = vrot.lane.b32.xlu0 %v1254, 112
        %v1334 = vpop.permute.xlu0 %1333
        %v1335 = vsel %vm356, %v1334, 0
        %v1337 = vsel %vm356, %v1254, 0
        %1339 = vmatpush.xpose.msra.mxu0 0.0
        %1340 = vmatpush.xpose.msra.mxu0 0.0
        %1341 = vmatpush.xpose.msra.mxu0 0.0
        %1342 = vmatpush.xpose.msra.mxu0 0.0
        %1343 = vmatpush.xpose.msra.mxu0 0.0
        %1344 = vmatpush.xpose.msra.mxu0 0.0
        %1345 = vmatpush.xpose.msra.mxu0 0.0
        %1346 = vmatpush.xpose.msra.mxu0 0.0
        %1347 = vmatpush.xpose.msra.mxu0 0.0
        %1348 = vmatpush.xpose.msra.mxu0 0.0
        %1349 = vmatpush.xpose.msra.mxu0 0.0
        %1350 = vmatpush.xpose.msra.mxu0 0.0
        %1351 = vmatpush.xpose.msra.mxu0 0.0
        %1352 = vmatpush.xpose.msra.mxu0 0.0
        %1353 = vmatpush.xpose.msra.mxu0 0.0
        %1354 = vmatpush.xpose.msra.mxu0 %v1337
        %1355 = vmatmul.f32.gmra.mxu0 %v1335
        %v1356 = vpop.f32.mrf.mxu0
        %v1357 = vadd.f32 %v280, %v1356
        %1358 = vdwg.mxu0
        %v1359 = vsel %vm459, %v1279, -inf
        %1360 = vmax.xlane.f32.xlu0 %v1359
        %v1361 = vpop.xlane.xlu0 %1360
        %v1362 = vsel %vm459, %v1305, -inf
        %1363 = vmax.xlane.f32.xlu0 %v1362
        %v1364 = vpop.xlane.xlu0 %1363
        %v1365 = vsel %vm459, %v1331, -inf
        %1366 = vmax.xlane.f32.xlu0 %v1365
        %v1367 = vpop.xlane.xlu0 %1366
        %v1368 = vsel %vm459, %v1357, -inf
        %1369 = vmax.xlane.f32.xlu0 %v1368
        %v1370 = vpop.xlane.xlu0 %1369
        %v1371 = vsub.f32 %v1279, %v1361
        %v1372 = vsub.f32 %v1305, %v1364
        %v1373 = vsub.f32 %v1331, %v1367
        %v1374 = vsub.f32 %v1357, %v1370
        %v1375 = vmul.f32 %v1371, 1.442695
        %v1376 = vpow.pop %v1375
        %v1377 = vmul.f32 %v1372, 1.442695
        %v1378 = vpow.pop %v1377
        %v1379 = vmul.f32 %v1373, 1.442695
        %v1380 = vpow.pop %v1379
        %v1381 = vmul.f32 %v1374, 1.442695
        %v1382 = vpow.pop %v1381
        %v1383 = vsel %vm459, %v1376, 0.0
        %1384 = vadd.xlane.f32.xlu0 %v1383
        %v1385 = vpop.xlane.xlu0 %1384
        %v1386 = vsel %vm459, %v1378, 0.0
        %1387 = vadd.xlane.f32.xlu0 %v1386
        %v1388 = vpop.xlane.xlu0 %1387
        %v1389 = vsel %vm459, %v1380, 0.0
        %1390 = vadd.xlane.f32.xlu0 %v1389
        %v1391 = vpop.xlane.xlu0 %1390
        %v1392 = vsel %vm459, %v1382, 0.0
        %1393 = vadd.xlane.f32.xlu0 %v1392
        %v1394 = vpop.xlane.xlu0 %1393
        %v1395 = vrcp.pop %v1385
        %v1396 = vrcp.pop %v1388
        %v1397 = vrcp.pop %v1391
        %v1398 = vrcp.pop %v1394
        %v1399 = vmul.f32 %v1376, %v1395
        %v1400 = vmul.f32 %v1378, %v1396
        %v1401 = vmul.f32 %v1380, %v1397
        %v1402 = vmul.f32 %v1382, %v1398
        %1403 = vrot.lane.b32.xlu0 %v1246, 96
        %v1404 = vpop.permute.xlu0 %1403
        %v1407 = vsel %vm459, %v1399, 0
        %1409 = vmatpush.msra.mxu0 0.0
        %1410 = vmatpush.msra.mxu0 0.0
        %1411 = vmatpush.msra.mxu0 0.0
        %1412 = vmatpush.msra.mxu0 0.0
        %1413 = vmatpush.msra.mxu0 0.0
        %1414 = vmatpush.msra.mxu0 0.0
        %1415 = vmatpush.msra.mxu0 0.0
        %1416 = vmatpush.msra.mxu0 0.0
        %1417 = vmatpush.msra.mxu0 0.0
        %1418 = vmatpush.msra.mxu0 0.0
        %1419 = vmatpush.msra.mxu0 0.0
        %1420 = vmatpush.msra.mxu0 0.0
        %1421 = vmatpush.msra.mxu0 0.0
        %1422 = vmatpush.msra.mxu0 0.0
        %1423 = vmatpush.msra.mxu0 0.0
        %1424 = vmatpush.msra.mxu0 %v1404
        %1425 = vmatmul.f32.gmra.mxu0 %v1407
        %v1426 = vpop.f32.mrf.mxu0
        %v1427 = vadd.f32 0.0, %v1426
        %1428 = vdwg.mxu0
        %1429 = vrot.lane.b32.xlu0 %v1250, 96
        %v1430 = vpop.permute.xlu0 %1429
        %v1433 = vsel %vm459, %v1400, 0
        %1435 = vmatpush.msra.mxu0 0.0
        %1436 = vmatpush.msra.mxu0 0.0
        %1437 = vmatpush.msra.mxu0 0.0
        %1438 = vmatpush.msra.mxu0 0.0
        %1439 = vmatpush.msra.mxu0 0.0
        %1440 = vmatpush.msra.mxu0 0.0
        %1441 = vmatpush.msra.mxu0 0.0
        %1442 = vmatpush.msra.mxu0 0.0
        %1443 = vmatpush.msra.mxu0 0.0
        %1444 = vmatpush.msra.mxu0 0.0
        %1445 = vmatpush.msra.mxu0 0.0
        %1446 = vmatpush.msra.mxu0 0.0
        %1447 = vmatpush.msra.mxu0 0.0
        %1448 = vmatpush.msra.mxu0 0.0
        %1449 = vmatpush.msra.mxu0 0.0
        %1450 = vmatpush.msra.mxu0 %v1430
        %1451 = vmatmul.f32.gmra.mxu0 %v1433
        %v1452 = vpop.f32.mrf.mxu0
        %v1453 = vadd.f32 0.0, %v1452
        %1454 = vdwg.mxu0
        %1455 = vrot.lane.b32.xlu0 %v1252, 96
        %v1456 = vpop.permute.xlu0 %1455
        %v1459 = vsel %vm459, %v1401, 0
        %1461 = vmatpush.msra.mxu0 0.0
        %1462 = vmatpush.msra.mxu0 0.0
        %1463 = vmatpush.msra.mxu0 0.0
        %1464 = vmatpush.msra.mxu0 0.0
        %1465 = vmatpush.msra.mxu0 0.0
        %1466 = vmatpush.msra.mxu0 0.0
        %1467 = vmatpush.msra.mxu0 0.0
        %1468 = vmatpush.msra.mxu0 0.0
        %1469 = vmatpush.msra.mxu0 0.0
        %1470 = vmatpush.msra.mxu0 0.0
        %1471 = vmatpush.msra.mxu0 0.0
        %1472 = vmatpush.msra.mxu0 0.0
        %1473 = vmatpush.msra.mxu0 0.0
        %1474 = vmatpush.msra.mxu0 0.0
        %1475 = vmatpush.msra.mxu0 0.0
        %1476 = vmatpush.msra.mxu0 %v1456
        %1477 = vmatmul.f32.gmra.mxu0 %v1459
        %v1478 = vpop.f32.mrf.mxu0
        %v1479 = vadd.f32 0.0, %v1478
        %1480 = vdwg.mxu0
        %1481 = vrot.lane.b32.xlu0 %v1254, 96
        %v1482 = vpop.permute.xlu0 %1481
        %v1485 = vsel %vm459, %v1402, 0
        %1487 = vmatpush.msra.mxu0 0.0
        %1488 = vmatpush.msra.mxu0 0.0
        %1489 = vmatpush.msra.mxu0 0.0
        %1490 = vmatpush.msra.mxu0 0.0
        %1491 = vmatpush.msra.mxu0 0.0
        %1492 = vmatpush.msra.mxu0 0.0
        %1493 = vmatpush.msra.mxu0 0.0
        %1494 = vmatpush.msra.mxu0 0.0
        %1495 = vmatpush.msra.mxu0 0.0
        %1496 = vmatpush.msra.mxu0 0.0
        %1497 = vmatpush.msra.mxu0 0.0
        %1498 = vmatpush.msra.mxu0 0.0
        %1499 = vmatpush.msra.mxu0 0.0
        %1500 = vmatpush.msra.mxu0 0.0
        %1501 = vmatpush.msra.mxu0 0.0
        %1502 = vmatpush.msra.mxu0 %v1482
        %1503 = vmatmul.f32.gmra.mxu0 %v1485
        %v1504 = vpop.f32.mrf.mxu0
        %v1505 = vadd.f32 0.0, %v1504
        %1506 = vdwg.mxu0
        %1508 = vrot.lane.b32.xlu0 %v1453, 4
        %v1509 = vpop.permute.xlu0 %1508
        %1512 = vrot.lane.b32.xlu0 %v1479, 8
        %v1513 = vpop.permute.xlu0 %1512
        %1516 = vrot.lane.b32.xlu0 %v1505, 12
        %v1517 = vpop.permute.xlu0 %1516
        %v1519 = vsel %vm356, %v1427, %v1509
        %v1520 = vsel %vm459, %v1519, %v1513
        %v1521 = vsel %vm622, %v1520, %v1517
        %s1522 = scalar_lea.vmem %s2, 32
        %v1523 = vld [vmem:[%s1522] sm:$0xff]
        %v1524 = vld [vmem:[%s1522 + $0x8] sm:$0xff]
        %v1526 = vsel %vm288, %v1521, 0
        %1528 = vmatpush.msra.mxu0 0.0
        %1529 = vmatpush.msra.mxu0 0.0
        %1530 = vmatpush.msra.mxu0 0.0
        %1531 = vmatpush.msra.mxu0 0.0
        %1532 = vmatpush.msra.mxu0 0.0
        %1533 = vmatpush.msra.mxu0 0.0
        %1534 = vmatpush.msra.mxu0 0.0
        %1535 = vmatpush.msra.mxu0 0.0
        %1536 = vmatpush.msra.mxu0 0.0
        %1537 = vmatpush.msra.mxu0 0.0
        %1538 = vmatpush.msra.mxu0 0.0
        %1539 = vmatpush.msra.mxu0 0.0
        %1540 = vmatpush.msra.mxu0 0.0
        %1541 = vmatpush.msra.mxu0 0.0
        %1542 = vmatpush.msra.mxu0 %v1524
        %1543 = vmatpush.msra.mxu0 %v1523
        %1544 = vmatmul.f32.gmra.mxu0 %v1526
        %v1545 = vpop.f32.mrf.mxu0
        %v1546 = vadd.f32 0.0, %v1545
        %1547 = vdwg.mxu0
        %v1548 = vadd.f32 %v1188, %v1546
        %v1549 = vperm.slane %v1193, 0
        %v1550 = vadd.f32 %v1548, %v1549
        %v1551 = vsel %vm288, %v1550, 0.0
        %1552 = vadd.xlane.f32.xlu0 %v1551
        %v1553 = vpop.xlane.xlu0 %1552
        %v1554 = vmul.f32 %v1553, %v298
        %v1555 = vsub.f32 %v1550, %v1554
        %v1556 = vmul.f32 %v1555, %v1555
        %v1557 = vsel %vm288, %v1556, 0.0
        %1558 = vadd.xlane.f32.xlu0 %v1557
        %v1559 = vpop.xlane.xlu0 %1558
        %v1560 = vmul.f32 %v1559, %v298
        %v1561 = vadd.f32 %v1560, 1e-05
        %v1562 = vrsqrt.pop %v1561
        %v1563 = vmul.f32 %v1562, %v1561
        %v1564 = vmul.f32 %v1563, %v1562
        %v1565 = vmul.f32 0.5, %v1564
        %v1566 = vsub.f32 1.5, %v1565
        %v1567 = vmul.f32 %v1562, %v1566
        %vm1568 = vweird.f32 %v1561
        %vm1569 = vweird.f32 %v1562
        %vm1570 = vmor %vm1568, %vm1569
        %v1571 = vsel %vm1570, %v1562, %v1567
        %v1572 = vmul.f32 %v1555, %v1571
        %v1573 = vperm.slane %v1191, 0
        %v1574 = vmul.f32 %v1572, %v1573
        %v1575 = vperm.slane %v1192, 0
        %v1576 = vadd.f32 %v1574, %v1575
        %s1577 = scalar_lea.vmem %s3, 32
        %v1578 = vld [vmem:[%s1577] sm:$0xff]
        %v1579 = vld [vmem:[%s1577 + $0x8] sm:$0xff]
        %v1580 = vperm.slane %v1195, 0
        %v1582 = vsel %vm288, %v1576, 0
        %1584 = vmatpush.msra.mxu0 0.0
        %1585 = vmatpush.msra.mxu0 0.0
        %1586 = vmatpush.msra.mxu0 0.0
        %1587 = vmatpush.msra.mxu0 0.0
        %1588 = vmatpush.msra.mxu0 0.0
        %1589 = vmatpush.msra.mxu0 0.0
        %1590 = vmatpush.msra.mxu0 0.0
        %1591 = vmatpush.msra.mxu0 0.0
        %1592 = vmatpush.msra.mxu0 0.0
        %1593 = vmatpush.msra.mxu0 0.0
        %1594 = vmatpush.msra.mxu0 0.0
        %1595 = vmatpush.msra.mxu0 0.0
        %1596 = vmatpush.msra.mxu0 0.0
        %1597 = vmatpush.msra.mxu0 0.0
        %1598 = vmatpush.msra.mxu0 %v1579
        %1599 = vmatpush.msra.mxu0 %v1578
        %1600 = vmatmul.f32.gmra.mxu0 %v1582
        %v1601 = vpop.f32.mrf.mxu0
        %v1602 = vadd.f32 %v1580, %v1601
        %1603 = vdwg.mxu0
        %v1604 = vmax.f32 %v1602, 0.0
        %s1605 = scalar_lea.vmem %s4, 128
        %v1606 = vld [vmem:[%s1605] sm:$0xff]
        %v1607 = vld [vmem:[%s1605 + $0x8] sm:$0xff]
        %v1608 = vld [vmem:[%s1605 + $0x10] sm:$0xff]
        %v1609 = vld [vmem:[%s1605 + $0x18] sm:$0xff]
        %v1610 = vld [vmem:[%s1605 + $0x20] sm:$0xff]
        %v1611 = vld [vmem:[%s1605 + $0x28] sm:$0xff]
        %v1612 = vld [vmem:[%s1605 + $0x30] sm:$0xff]
        %v1613 = vld [vmem:[%s1605 + $0x38] sm:$0xff]
        %v1614 = vperm.slane %v1194, 0
        %v1616 = vsel %vm714, %v1604, 0
        %1618 = vmatpush.msra.mxu0 0.0
        %1619 = vmatpush.msra.mxu0 0.0
        %1620 = vmatpush.msra.mxu0 0.0
        %1621 = vmatpush.msra.mxu0 0.0
        %1622 = vmatpush.msra.mxu0 0.0
        %1623 = vmatpush.msra.mxu0 0.0
        %1624 = vmatpush.msra.mxu0 0.0
        %1625 = vmatpush.msra.mxu0 0.0
        %1626 = vmatpush.msra.mxu0 %v1613
        %1627 = vmatpush.msra.mxu0 %v1612
        %1628 = vmatpush.msra.mxu0 %v1611
        %1629 = vmatpush.msra.mxu0 %v1610
        %1630 = vmatpush.msra.mxu0 %v1609
        %1631 = vmatpush.msra.mxu0 %v1608
        %1632 = vmatpush.msra.mxu0 %v1607
        %1633 = vmatpush.msra.mxu0 %v1606
        %1634 = vmatmul.f32.gmra.mxu0 %v1616
        %v1635 = vpop.f32.mrf.mxu0
        %v1636 = vadd.f32 %v1614, %v1635
        %1637 = vdwg.mxu0
        %v1638 = vadd.f32 %v1550, %v1636
        %v1639 = vld [vmem:[%s6 + $0x15] sm:$0x1]
        %v1640 = vld [vmem:[%s6 + $0x16] sm:$0x1]
        %v1641 = vld [vmem:[%s6 + $0x17] sm:$0x1]
        %v1642 = vsel %vm288, %v1638, 0.0
        %1643 = vadd.xlane.f32.xlu0 %v1642
        %v1644 = vpop.xlane.xlu0 %1643
        %v1645 = vmul.f32 %v1644, %v298
        %v1646 = vsub.f32 %v1638, %v1645
        %v1647 = vmul.f32 %v1646, %v1646
        %v1648 = vsel %vm288, %v1647, 0.0
        %1649 = vadd.xlane.f32.xlu0 %v1648
        %v1650 = vpop.xlane.xlu0 %1649
        %v1651 = vmul.f32 %v1650, %v298
        %v1652 = vadd.f32 %v1651, 1e-05
        %v1653 = vrsqrt.pop %v1652
        %v1654 = vmul.f32 %v1653, %v1652
        %v1655 = vmul.f32 %v1654, %v1653
        %v1656 = vmul.f32 0.5, %v1655
        %v1657 = vsub.f32 1.5, %v1656
        %v1658 = vmul.f32 %v1653, %v1657
        %vm1659 = vweird.f32 %v1652
        %vm1660 = vweird.f32 %v1653
        %vm1661 = vmor %vm1659, %vm1660
        %v1662 = vsel %vm1661, %v1653, %v1658
        %v1663 = vmul.f32 %v1646, %v1662
        %v1664 = vperm.slane %v1639, 0
        %v1665 = vmul.f32 %v1663, %v1664
        %v1666 = vperm.slane %v1640, 0
        %v1667 = vadd.f32 %v1665, %v1666
        %v1668 = vld [vmem:[%s5] sm:$0xff]
        %v1669 = vld [vmem:[%s5 + $0x8] sm:$0xff]
        %v1670 = vperm.slane %v1641, 0
        %v1672 = vsel %vm288, %v1667, 0
        %1674 = vmatpush.msra.mxu0 0.0
        %1675 = vmatpush.msra.mxu0 0.0
        %1676 = vmatpush.msra.mxu0 0.0
        %1677 = vmatpush.msra.mxu0 0.0
        %1678 = vmatpush.msra.mxu0 0.0
        %1679 = vmatpush.msra.mxu0 0.0
        %1680 = vmatpush.msra.mxu0 0.0
        %1681 = vmatpush.msra.mxu0 0.0
        %1682 = vmatpush.msra.mxu0 0.0
        %1683 = vmatpush.msra.mxu0 0.0
        %1684 = vmatpush.msra.mxu0 0.0
        %1685 = vmatpush.msra.mxu0 0.0
        %1686 = vmatpush.msra.mxu0 0.0
        %1687 = vmatpush.msra.mxu0 0.0
        %1688 = vmatpush.msra.mxu0 %v1669
        %1689 = vmatpush.msra.mxu0 %v1668
        %1690 = vmatmul.f32.gmra.mxu0 %v1672
        %v1691 = vpop.f32.mrf.mxu0
        %v1692 = vadd.f32 %v1670, %v1691
        %1693 = vdwg.mxu0
        %1694 = vst [vmem:[%s269] sm:$0xff] %v1692
        %s1695 = sand.u32 %s181, 1
        %s1696 = scalar_lea.sflag [#allocation3], %s1695
        %s1697 = sand.u32 %s181, 1
        %s1698 = smul.addr %s1697, 8
        %s1699 = scalar_lea.vmem [#allocation2], %s1698
        // Predicated region
        $region49: #{bigram_lm_forward.1} parent=47 // pred_check
          %p1700 = pneg %p191
        $region50: #{bigram_lm_forward.1} parent=47 // pred_check_branch
          %1702 = sbr.rel (%p1700) target = $region52
        $region51: #{bigram_lm_forward.1} parent=47 // pred_region
          %1704 = vsyncadd %s1696, 0
          %s1705 = smul.addr %s21, 8
          %s1706 = scalar_lea.hbm %s7, %s1705
          %s1708 = sshll.u32 %s1699, 4
          %s1709 = int_to_ptr.vmem [resolvable:$true] %s1708
          %s1710 = sshll.u32 %s1706, 4
          %s1711 = int_to_ptr.hbm [resolvable:$true] %s1710
          %1713 = dma.vmem_to_hbm [thread:$0]  %s1709, 128, %s1711, %s1696
        $region52: #{bigram_lm_forward.1} parent=47 // pred_fallthru
          _
      $region48: #{bigram_lm_forward.1} parent=5 // pred_fallthru
        _
      %p1714 = scmp.le.s32.totalorder 2, %s16
      // Predicated region
      $region53: #{bigram_lm_forward.1} parent=5 // pred_check
        %p1715 = pneg %p1714
      $region54: #{bigram_lm_forward.1} parent=5 // pred_check_branch
        %1717 = sbr.rel (%p1715) target = $region56
      $region55: #{bigram_lm_forward.1} parent=5 // pred_region
        %s1718 = ssub.s32 %s16, 2
        // Predicated region
        $region57: #{bigram_lm_forward.1} parent=55 // pred_check
          %p1719 = pneg %p197
        $region58: #{bigram_lm_forward.1} parent=55 // pred_check_branch
          %1721 = sbr.rel (%p1719) target = $region60
        $region59: #{bigram_lm_forward.1} parent=55 // pred_region
          %s1722 = sand.u32 %s182, 1
          %s1723 = scalar_lea.sflag [#allocation3], %s1722
          %s1724 = sand.u32 %s182, 1
          %s1725 = smul.addr %s1724, 8
          %s1726 = scalar_lea.vmem [#allocation2], %s1725
          %1728 = dma.done %s1723, 128
        $region60: #{bigram_lm_forward.1} parent=55 // pred_fallthru
          _
      $region56: #{bigram_lm_forward.1} parent=5 // pred_fallthru
        _
    $region6: #{bigram_lm_forward.1} parent=1 // loop_footer
      %s20 = sadd.s32 1, %s16
    $region7: #{bigram_lm_forward.1} parent=1 // loop_footer_branch
      %15 = sbr.rel target = $region3
    $region8: #{bigram_lm_forward.1} parent=1 // loop_exit
      _
    %1729 = vsyncpa [#allocation3], 1
    %s1730 = scalar_lea.sflag [#allocation3], 1
    %1731 = vsyncpa %s1730, 1

</llo_original>
